<compile_context>
chip_gen: v5e
topology: v5e:2x2
jax: 0.10.0
libtpu: 0.0.40
codegen_flags: <defaults>
</compile_context>

<pallas_src>
import jax
import jax.numpy as jnp
from jax.experimental import pallas as pl
from jax.experimental.pallas import tpu as pltpu

NEG_SLOPE = 0.2
C1, C2 = 128, 256   # hidden channel counts from the module definition


def _leaky(v):
    return jnp.where(v >= 0, v, NEG_SLOPE * v)


def _make_branch_kernel(use_bf16: bool):
    def kernel(x_ref, keep_prev_ref, keep_next_ref,
               w1_ref, b1_ref, w2_ref, b2_ref, w3_ref, b3_ref, out_ref):
        # x_ref          : (1, 1, L)   L = block_n * W samples flattened on the lane axis
        # keep_prev/next : (1, L)      0.0 where the +/-1 tap falls on conv zero padding
        # w1 (C1,3)  b1 (C1,1)  w2 (C2,3*C1)  b2 (C2,1)  w3 (3,C2)  b3 (1,1) in SMEM
        # out_ref        : (1, 1, L)   lane-dense output block
        keep_prev = keep_prev_ref[...]
        keep_next = keep_next_ref[...]

        def shift_prev(a):   # result[:, r] = a[:, r-1]; 0 where r-1 is conv padding
            return pltpu.roll(a, 1, axis=1) * keep_prev

        def shift_next(a):   # result[:, r] = a[:, r+1]; 0 where r+1 is conv padding
            return pltpu.roll(a, a.shape[1] - 1, axis=1) * keep_next

        x = x_ref[0]                                     # (1, L), lane-dense
        x_prev = shift_prev(x)
        x_next = shift_next(x)

        # conv1 (1 -> 128): Cin == 1, so this is an outer product done with VPU broadcasts.
        w1 = w1_ref[...]                                 # (C1, 3)
        h1 = _leaky(w1[:, 0:1] * x_prev + w1[:, 1:2] * x + w1[:, 2:3] * x_next
                    + b1_ref[...])                       # (C1, L)

        # conv2 (128 -> 256): im2col over the 3 taps (stacked on sublanes) -> one MXU matmul.
        taps = jnp.concatenate([shift_prev(h1), h1, shift_next(h1)], axis=0)   # (3*C1, L)
        w2 = w2_ref[...]                                 # (C2, 3*C1)
        if use_bf16:   # optional bf16 MXU inputs (v6e/v7x); accumulation stays f32
            w2 = w2.astype(jnp.bfloat16)
            taps = taps.astype(jnp.bfloat16)
        h2 = _leaky(jnp.dot(w2, taps, preferred_element_type=jnp.float32)
                    + b2_ref[...])                       # (C2, L)

        # conv3 (256 -> 1): per-tap channel contraction, then a shifted lane-dense add.
        t = jnp.dot(w3_ref[...], h2, preferred_element_type=jnp.float32)       # (3, L)
        pre = (shift_prev(t[0:1, :]) + t[1:2, :] + shift_next(t[2:3, :])
               + b3_ref[0, 0])                           # (1, L)
        out_ref[0] = _leaky(pre)

    return kernel


def iclabel_conv1d_branch_forward(x_nchw, torch_params, *, block_n=8, use_bf16=False):
    """Forward pass of the _ICLabelNetPSDS / _ICLabelNetAutocorr branch.

    x_nchw: (N, 1, 1, W) float32 (PyTorch NCHW).  torch_params in PyTorch layout:
    (w1 (128,1,1,3), b1 (128,), w2 (256,128,1,3), b2 (256,), w3 (1,256,1,3), b3 (1,)).
    """
    w1, b1, w2, b2, w3, b3 = torch_params
    N, C, H, W = x_nchw.shape
    assert C == 1 and H == 1, "this branch expects NCHW input with C = H = 1"

    n_blocks = pl.cdiv(N, block_n)
    n_pad = n_blocks * block_n
    lanes = block_n * W                     # flattened (sample, position) lane axis

    x = x_nchw.astype(jnp.float32).reshape(N, W)
    if n_pad != N:
        x = jnp.pad(x, ((0, n_pad - N), (0, 0)))
    x = x.reshape(n_blocks, 1, lanes)

    # 0/1 masks marking where the +/-1 tap of each sample falls on the conv zero padding.
    pos = jnp.arange(lanes, dtype=jnp.int32) % W
    keep_prev = (pos != 0).astype(jnp.float32).reshape(1, lanes)
    keep_next = (pos != W - 1).astype(jnp.float32).reshape(1, lanes)

    # Kernel-layout weights (channels on sublanes).
    w1k = w1.reshape(C1, 3).astype(jnp.float32)                                  # (128, 3)
    b1k = b1.reshape(C1, 1).astype(jnp.float32)
    w2k = jnp.transpose(w2.reshape(C2, C1, 3), (0, 2, 1)).reshape(C2, 3 * C1)    # (256, 384)
    w2k = w2k.astype(jnp.float32)
    b2k = b2.reshape(C2, 1).astype(jnp.float32)
    w3k = jnp.transpose(w3.reshape(C2, 3), (1, 0)).astype(jnp.float32)           # (3, 256)
    b3k = b3.reshape(1, 1).astype(jnp.float32)

    out = pl.pallas_call(
        _make_branch_kernel(use_bf16),
        out_shape=jax.ShapeDtypeStruct((n_blocks, 1, lanes), jnp.float32),
        grid=(n_blocks,),
        in_specs=[
            pl.BlockSpec((1, 1, lanes), lambda i: (i, 0, 0)),        # x block
            pl.BlockSpec((1, lanes), lambda i: (0, 0)),              # keep_prev mask
            pl.BlockSpec((1, lanes), lambda i: (0, 0)),              # keep_next mask
            pl.BlockSpec((C1, 3), lambda i: (0, 0)),                 # w1
            pl.BlockSpec((C1, 1), lambda i: (0, 0)),                 # b1
            pl.BlockSpec((C2, 3 * C1), lambda i: (0, 0)),            # w2
            pl.BlockSpec((C2, 1), lambda i: (0, 0)),                 # b2
            pl.BlockSpec((3, C2), lambda i: (0, 0)),                 # w3
            pl.BlockSpec(memory_space=pltpu.MemorySpace.SMEM),       # b3 scalar
        ],
        out_specs=pl.BlockSpec((1, 1, lanes), lambda i: (i, 0, 0)),
        compiler_params=pltpu.CompilerParams(
            dimension_semantics=("parallel",),
            vmem_limit_bytes=32 * 1024 * 1024,
        ),
    )(x, keep_prev, keep_next, w1k, b1k, w2k, b2k, w3k, b3k)

    out = out.reshape(n_pad, W)[:N]
    return out.reshape(N, 1, 1, W)


def init_params(key):
    """Deterministic synthetic weights in PyTorch Conv2d layout."""
    ks = jax.random.split(key, 6)
    w1 = jax.random.normal(ks[0], (C1, 1, 1, 3), jnp.float32) * 0.10
    b1 = jax.random.normal(ks[1], (C1,), jnp.float32) * 0.10
    w2 = jax.random.normal(ks[2], (C2, C1, 1, 3), jnp.float32) * 0.05
    b2 = jax.random.normal(ks[3], (C2,), jnp.float32) * 0.05
    w3 = jax.random.normal(ks[4], (1, C2, 1, 3), jnp.float32) * 0.05
    b3 = jax.random.normal(ks[5], (1,), jnp.float32) * 0.05
    return (w1, b1, w2, b2, w3, b3)


def ref_forward(x_nchw, torch_params):
    """Pure-XLA reference with PyTorch Conv2d semantics (for the correctness check)."""
    w1, b1, w2, b2, w3, b3 = torch_params

    def conv_leaky(x, w, b):
        y = jax.lax.conv_general_dilated(
            x, w, window_strides=(1, 1), padding=((0, 0), (1, 1)),
            dimension_numbers=("NCHW", "OIHW", "NCHW"),
            precision=jax.lax.Precision.HIGHEST)
        y = y + b.reshape(1, -1, 1, 1)
        return jnp.where(y >= 0, y, NEG_SLOPE * y)

    h = conv_leaky(x_nchw.astype(jnp.float32), w1, b1)
    h = conv_leaky(h, w2, b2)
    h = conv_leaky(h, w3, b3)
    return h


if __name__ == "__main__":
    key = jax.random.PRNGKey(0)
    kx, kp = jax.random.split(key)

    # Small shapes consistent with the branch: batch = 12 ICs, C = 1, H = 1, W = 16.
    N, W = 12, 16
    x = jax.random.normal(kx, (N, 1, 1, W), jnp.float32)
    params = init_params(kp)

    out = jax.block_until_ready(iclabel_conv1d_branch_forward(x, params, block_n=8))
    ref = ref_forward(x, params)

    assert out.shape == (N, 1, 1, W), out.shape
    if not jnp.allclose(out, ref, atol=2e-3, rtol=2e-3):
        err = float(jnp.max(jnp.abs(out - ref)))
        raise AssertionError(f"Pallas kernel mismatch vs reference (max abs err = {err:.3e})")

    print("KERNEL_OK")
</pallas_src>

<mosaic_0001>
module attributes {stable_mosaic.version = 11 : i64} {
  func.func @kernel(%arg0: i32, %arg1: memref<1x1x128xf32, #tpu.memory_space<vmem>>, %arg2: memref<1x128xf32, #tpu.memory_space<vmem>>, %arg3: memref<1x128xf32, #tpu.memory_space<vmem>>, %arg4: memref<128x3xf32, #tpu.memory_space<vmem>>, %arg5: memref<128x1xf32, #tpu.memory_space<vmem>>, %arg6: memref<256x384xf32, #tpu.memory_space<vmem>>, %arg7: memref<256x1xf32, #tpu.memory_space<vmem>>, %arg8: memref<3x256xf32, #tpu.memory_space<vmem>>, %arg9: memref<1x1xf32, #tpu.memory_space<smem>>, %arg10: memref<1x1x128xf32, #tpu.memory_space<vmem>>) attributes {dimension_semantics = [#tpu.dimension_semantics<parallel>], iteration_bounds = array<i64: 2>, scalar_prefetch = 0 : i64, scratch_operands = 0 : i64, tpu.core_type = #tpu.core_type<tc>, window_params = [{transform_indices = @transform_0, window_bounds = array<i64: 1, 1, 128>}, {pipeline_mode = #tpu.pipeline_mode<synchronous>, transform_indices = @transform_1, window_bounds = array<i64: 1, 128>}, {pipeline_mode = #tpu.pipeline_mode<synchronous>, transform_indices = @transform_2, window_bounds = array<i64: 1, 128>}, {pipeline_mode = #tpu.pipeline_mode<synchronous>, transform_indices = @transform_3, window_bounds = array<i64: 128, 3>}, {pipeline_mode = #tpu.pipeline_mode<synchronous>, transform_indices = @transform_4, window_bounds = array<i64: 128, 1>}, {pipeline_mode = #tpu.pipeline_mode<synchronous>, transform_indices = @transform_5, window_bounds = array<i64: 256, 384>}, {pipeline_mode = #tpu.pipeline_mode<synchronous>, transform_indices = @transform_6, window_bounds = array<i64: 256, 1>}, {pipeline_mode = #tpu.pipeline_mode<synchronous>, transform_indices = @transform_7, window_bounds = array<i64: 3, 256>}, {transform_indices = @transform_8, window_bounds = array<i64: 1, 1>}, {transform_indices = @transform_9, window_bounds = array<i64: 1, 1, 128>}]} {
    %c0 = arith.constant 0 : index
    %c0_0 = arith.constant 0 : index
    %0 = vector.load %arg2[%c0, %c0_0] : memref<1x128xf32, #tpu.memory_space<vmem>>, vector<1x128xf32>
    %c0_1 = arith.constant 0 : index
    %c0_2 = arith.constant 0 : index
    %1 = vector.load %arg3[%c0_1, %c0_2] : memref<1x128xf32, #tpu.memory_space<vmem>>, vector<1x128xf32>
    %c0_3 = arith.constant 0 : index
    %c0_4 = arith.constant 0 : index
    %c0_5 = arith.constant 0 : index
    %2 = vector.load %arg1[%c0_3, %c0_4, %c0_5] : memref<1x1x128xf32, #tpu.memory_space<vmem>>, vector<1x1x128xf32>
    %3 = vector.shape_cast %2 : vector<1x1x128xf32> to vector<1x128xf32>
    %c1_i32 = arith.constant 1 : i32
    %4 = tpu.dynamic_rotate %3 by %c1_i32 dim 1 : vector<1x128xf32>, i32 -> vector<1x128xf32>
    %5 = arith.mulf %4, %0 : vector<1x128xf32>
    %c127_i32 = arith.constant 127 : i32
    %6 = tpu.dynamic_rotate %3 by %c127_i32 dim 1 : vector<1x128xf32>, i32 -> vector<1x128xf32>
    %7 = arith.mulf %6, %1 : vector<1x128xf32>
    %c0_6 = arith.constant 0 : index
    %c0_7 = arith.constant 0 : index
    %8 = vector.load %arg4[%c0_6, %c0_7] : memref<128x3xf32, #tpu.memory_space<vmem>>, vector<128x3xf32>
    %9 = vector.extract_strided_slice %8 {offsets = [0, 0], sizes = [128, 1], strides = [1, 1]} : vector<128x3xf32> to vector<128x1xf32>
    %10 = vector.broadcast %9 : vector<128x1xf32> to vector<128x128xf32>
    %11 = vector.broadcast %5 : vector<1x128xf32> to vector<128x128xf32>
    %12 = arith.mulf %10, %11 : vector<128x128xf32>
    %13 = vector.extract_strided_slice %8 {offsets = [0, 1], sizes = [128, 1], strides = [1, 1]} : vector<128x3xf32> to vector<128x1xf32>
    %14 = vector.broadcast %13 : vector<128x1xf32> to vector<128x128xf32>
    %15 = vector.broadcast %3 : vector<1x128xf32> to vector<128x128xf32>
    %16 = arith.mulf %14, %15 : vector<128x128xf32>
    %17 = arith.addf %12, %16 : vector<128x128xf32>
    %18 = vector.extract_strided_slice %8 {offsets = [0, 2], sizes = [128, 1], strides = [1, 1]} : vector<128x3xf32> to vector<128x1xf32>
    %19 = vector.broadcast %18 : vector<128x1xf32> to vector<128x128xf32>
    %20 = vector.broadcast %7 : vector<1x128xf32> to vector<128x128xf32>
    %21 = arith.mulf %19, %20 : vector<128x128xf32>
    %22 = arith.addf %17, %21 : vector<128x128xf32>
    %c0_8 = arith.constant 0 : index
    %c0_9 = arith.constant 0 : index
    %23 = vector.load %arg5[%c0_8, %c0_9] : memref<128x1xf32, #tpu.memory_space<vmem>>, vector<128x1xf32>
    %24 = vector.broadcast %23 : vector<128x1xf32> to vector<128x128xf32>
    %25 = arith.addf %22, %24 : vector<128x128xf32>
    %cst = arith.constant 0.000000e+00 : f32
    %26 = vector.broadcast %cst : f32 to vector<128x128xf32>
    %27 = arith.cmpf oge, %25, %26 : vector<128x128xf32>
    %cst_10 = arith.constant 2.000000e-01 : f32
    %28 = vector.broadcast %cst_10 : f32 to vector<128x128xf32>
    %29 = arith.mulf %28, %25 : vector<128x128xf32>
    %30 = arith.select %27, %25, %29 : vector<128x128xi1>, vector<128x128xf32>
    %c1_i32_11 = arith.constant 1 : i32
    %31 = tpu.dynamic_rotate %30 by %c1_i32_11 dim 1 : vector<128x128xf32>, i32 -> vector<128x128xf32>
    %32 = vector.broadcast %0 : vector<1x128xf32> to vector<128x128xf32>
    %33 = arith.mulf %31, %32 : vector<128x128xf32>
    %c127_i32_12 = arith.constant 127 : i32
    %34 = tpu.dynamic_rotate %30 by %c127_i32_12 dim 1 : vector<128x128xf32>, i32 -> vector<128x128xf32>
    %35 = vector.broadcast %1 : vector<1x128xf32> to vector<128x128xf32>
    %36 = arith.mulf %34, %35 : vector<128x128xf32>
    %37 = tpu.concatenate %33, %30, %36 in 0 : vector<128x128xf32>, vector<128x128xf32>, vector<128x128xf32> -> vector<384x128xf32>
    %c0_13 = arith.constant 0 : index
    %c0_14 = arith.constant 0 : index
    %38 = vector.load %arg6[%c0_13, %c0_14] : memref<256x384xf32, #tpu.memory_space<vmem>>, vector<256x384xf32>
    %cst_15 = arith.constant dense<0.000000e+00> : vector<256x128xf32>
    %39 = tpu.matmul %38, %37, %cst_15 {dimension_numbers = #tpu.dot_dimension_numbers<[1], [0], [0], [1], [0, 0, 1, 1], [], []>} : vector<256x384xf32>, vector<384x128xf32>, vector<256x128xf32> -> vector<256x128xf32>
    %c0_16 = arith.constant 0 : index
    %c0_17 = arith.constant 0 : index
    %40 = vector.load %arg7[%c0_16, %c0_17] : memref<256x1xf32, #tpu.memory_space<vmem>>, vector<256x1xf32>
    %41 = vector.broadcast %40 : vector<256x1xf32> to vector<256x128xf32>
    %42 = arith.addf %39, %41 : vector<256x128xf32>
    %cst_18 = arith.constant 0.000000e+00 : f32
    %43 = vector.broadcast %cst_18 : f32 to vector<256x128xf32>
    %44 = arith.cmpf oge, %42, %43 : vector<256x128xf32>
    %cst_19 = arith.constant 2.000000e-01 : f32
    %45 = vector.broadcast %cst_19 : f32 to vector<256x128xf32>
    %46 = arith.mulf %45, %42 : vector<256x128xf32>
    %47 = arith.select %44, %42, %46 : vector<256x128xi1>, vector<256x128xf32>
    %c0_20 = arith.constant 0 : index
    %c0_21 = arith.constant 0 : index
    %48 = vector.load %arg8[%c0_20, %c0_21] : memref<3x256xf32, #tpu.memory_space<vmem>>, vector<3x256xf32>
    %cst_22 = arith.constant dense<0.000000e+00> : vector<3x128xf32>
    %49 = tpu.matmul %48, %47, %cst_22 {dimension_numbers = #tpu.dot_dimension_numbers<[1], [0], [0], [1], [0, 0, 1, 1], [], []>} : vector<3x256xf32>, vector<256x128xf32>, vector<3x128xf32> -> vector<3x128xf32>
    %50 = vector.extract_strided_slice %49 {offsets = [0, 0], sizes = [1, 128], strides = [1, 1]} : vector<3x128xf32> to vector<1x128xf32>
    %c1_i32_23 = arith.constant 1 : i32
    %51 = tpu.dynamic_rotate %50 by %c1_i32_23 dim 1 : vector<1x128xf32>, i32 -> vector<1x128xf32>
    %52 = arith.mulf %51, %0 : vector<1x128xf32>
    %53 = vector.extract_strided_slice %49 {offsets = [1, 0], sizes = [1, 128], strides = [1, 1]} : vector<3x128xf32> to vector<1x128xf32>
    %54 = arith.addf %52, %53 : vector<1x128xf32>
    %55 = vector.extract_strided_slice %49 {offsets = [2, 0], sizes = [1, 128], strides = [1, 1]} : vector<3x128xf32> to vector<1x128xf32>
    %c127_i32_24 = arith.constant 127 : i32
    %56 = tpu.dynamic_rotate %55 by %c127_i32_24 dim 1 : vector<1x128xf32>, i32 -> vector<1x128xf32>
    %57 = arith.mulf %56, %1 : vector<1x128xf32>
    %58 = arith.addf %54, %57 : vector<1x128xf32>
    %c0_25 = arith.constant 0 : index
    %c0_26 = arith.constant 0 : index
    %59 = memref.load %arg9[%c0_25, %c0_26] : memref<1x1xf32, #tpu.memory_space<smem>>
    %60 = vector.broadcast %59 : f32 to vector<1x128xf32>
    %61 = arith.addf %58, %60 : vector<1x128xf32>
    %cst_27 = arith.constant 0.000000e+00 : f32
    %62 = vector.broadcast %cst_27 : f32 to vector<1x128xf32>
    %63 = arith.cmpf oge, %61, %62 : vector<1x128xf32>
    %cst_28 = arith.constant 2.000000e-01 : f32
    %64 = vector.broadcast %cst_28 : f32 to vector<1x128xf32>
    %65 = arith.mulf %64, %61 : vector<1x128xf32>
    %66 = arith.select %63, %61, %65 : vector<1x128xi1>, vector<1x128xf32>
    %c0_29 = arith.constant 0 : index
    %c0_30 = arith.constant 0 : index
    %c0_31 = arith.constant 0 : index
    %67 = vector.load %arg10[%c0_29, %c0_30, %c0_31] : memref<1x1x128xf32, #tpu.memory_space<vmem>>, vector<1x1x128xf32>
    %68 = vector.shape_cast %67 : vector<1x1x128xf32> to vector<1x128xf32>
    %69 = vector.shape_cast %66 : vector<1x128xf32> to vector<1x1x128xf32>
    tpu.vector_store %arg10[%c0_29, %c0_30, %c0_31], %69 {strides = array<i32>} : memref<1x1x128xf32, #tpu.memory_space<vmem>>, vector<1x1x128xf32>,
    return
  }
  func.func @transform_0(%arg0: i32) -> (i32, i32, i32) {
    %c0_i32 = arith.constant 0 : i32
    %c0_i32_0 = arith.constant 0 : i32
    %c0_i32_1 = arith.constant 0 : i32
    return %arg0, %c0_i32, %c0_i32_0 : i32, i32, i32
  }
  func.func @transform_1(%arg0: i32) -> (i32, i32) {
    %c0_i32 = arith.constant 0 : i32
    %c0_i32_0 = arith.constant 0 : i32
    %c0_i32_1 = arith.constant 0 : i32
    return %c0_i32, %c0_i32_0 : i32, i32
  }
  func.func @transform_2(%arg0: i32) -> (i32, i32) {
    %c0_i32 = arith.constant 0 : i32
    %c0_i32_0 = arith.constant 0 : i32
    %c0_i32_1 = arith.constant 0 : i32
    return %c0_i32, %c0_i32_0 : i32, i32
  }
  func.func @transform_3(%arg0: i32) -> (i32, i32) {
    %c0_i32 = arith.constant 0 : i32
    %c0_i32_0 = arith.constant 0 : i32
    %c0_i32_1 = arith.constant 0 : i32
    return %c0_i32, %c0_i32_0 : i32, i32
  }
  func.func @transform_4(%arg0: i32) -> (i32, i32) {
    %c0_i32 = arith.constant 0 : i32
    %c0_i32_0 = arith.constant 0 : i32
    %c0_i32_1 = arith.constant 0 : i32
    return %c0_i32, %c0_i32_0 : i32, i32
  }
  func.func @transform_5(%arg0: i32) -> (i32, i32) {
    %c0_i32 = arith.constant 0 : i32
    %c0_i32_0 = arith.constant 0 : i32
    %c0_i32_1 = arith.constant 0 : i32
    return %c0_i32, %c0_i32_0 : i32, i32
  }
  func.func @transform_6(%arg0: i32) -> (i32, i32) {
    %c0_i32 = arith.constant 0 : i32
    %c0_i32_0 = arith.constant 0 : i32
    %c0_i32_1 = arith.constant 0 : i32
    return %c0_i32, %c0_i32_0 : i32, i32
  }
  func.func @transform_7(%arg0: i32) -> (i32, i32) {
    %c0_i32 = arith.constant 0 : i32
    %c0_i32_0 = arith.constant 0 : i32
    %c0_i32_1 = arith.constant 0 : i32
    return %c0_i32, %c0_i32_0 : i32, i32
  }
  func.func @transform_8(%arg0: i32) -> (i32, i32) {
    %c0_i32 = arith.constant 0 : i32
    %c0_i32_0 = arith.constant 0 : i32
    %c0_i32_1 = arith.constant 0 : i32
    return %c0_i32, %c0_i32_0 : i32, i32
  }
  func.func @transform_9(%arg0: i32) -> (i32, i32, i32) {
    %c0_i32 = arith.constant 0 : i32
    %c0_i32_0 = arith.constant 0 : i32
    %c0_i32_1 = arith.constant 0 : i32
    return %arg0, %c0_i32, %c0_i32_0 : i32, i32, i32
  }
}

</mosaic_0001>

<llo_original>
// kernel: tpu_custom_call.1
$region0: #{tpu_custom_call.1}
  #allocation0 [shape = 'u32[]', space=smem, size = 0x4, offset = 0x4, fixed_abs, tag = 'smem constant byte address 0x4 - core index']
  #allocation1 [shape = 'u32[72,128]{1,0:T(1,128)}', space=vmem, size = 0x9000, scoped, tag = 'internal scratch']
  #allocation2 [shape = 'f32[1,1]{1,0:T(1,128)S(6)}', space=smem, size = 0x200, scoped, tag = 'scoped memory for tpu_custom_call.1']
  %s0 = inlined_call_operand.vmem [shape: f32[2,1,128], index: 0, kind: input, shape index: {}]
  %s1 = inlined_call_operand.vmem [shape: f32[1,128], index: 1, kind: input, shape index: {}]
  %s2 = inlined_call_operand.vmem [shape: f32[1,128], index: 2, kind: input, shape index: {}]
  %s3 = inlined_call_operand.vmem [shape: f32[128,3], index: 3, kind: input, shape index: {}]
  %s4 = inlined_call_operand.vmem [shape: f32[128,1], index: 4, kind: input, shape index: {}]
  %s5 = inlined_call_operand.hbm [shape: f32[256,384], index: 5, kind: input, shape index: {}]
  %s6 = inlined_call_operand.vmem [shape: f32[256,1], index: 6, kind: input, shape index: {}]
  %s7 = inlined_call_operand.vmem [shape: f32[3,256], index: 7, kind: input, shape index: {}]
  %s8 = inlined_call_operand.<no memory space> [shape: f32[1,1], index: 8, kind: input, shape index: {}]
  %s9 = inlined_call_operand.hbm [shape: f32[2,1,128], index: 9, kind: output, shape index: {}]
  %s10 = sld [smem:[#allocation0]]
  $region73: #{tpu_custom_call.1} parent=0
    _
  %s12 = ssub.s32 1, %s10
  %s13 = scalar_select 0, %s12, %s10
  %14 = sst [smem:[#allocation2]] %s8
  $region1: #{tpu_custom_call.1} parent=0
    #allocation3 [shape = 'u8[393216]{0}', space=vmem, size = 0x60000, scoped, tag = 'input window, operand 5, single buffered']
    #allocation4 [shape = 's32[2]{0}', space=sflag, size = 0x8, scoped, tag = 'scoped memory for tpu_custom_call.1']
    #allocation5 [shape = 's32[2]{0}', space=sflag, size = 0x8, scoped, tag = 'scoped memory for tpu_custom_call.1']
    #allocation6 [shape = 'u8[1024]{0}', space=vmem, size = 0x400, scoped, tag = 'output window, operand 0']
    %15 = vsyncpa [#allocation4], 0
    %16 = vsyncpa [#allocation5], 0
    %s17 = scalar_lea.sflag [#allocation5], 1
    %18 = vsyncpa %s17, 0
    loop: start=0, step=1, limit=4
    $region2: #{tpu_custom_call.1} parent=1 // loop_pre_header
      _
    $region3: #{tpu_custom_call.1} parent=1 // loop_header
      %s20 = sphi 0, %s24
      %p21 = scmp.ge.s32.totalorder %s20, 4
      %s30 = sphi 0, %s32
      %s33 = sphi 0, %s30
      %s34 = sphi 0, %s33
      %s50 = sphi 0, %s34
      %s54 = sphi 0, %s54
      %s56 = sphi 0, %s54
      %s57 = sphi 0, %s56
      %s71 = sphi 0, %s57
      %s75 = sphi 0, %s75
      %s77 = sphi 0, %s75
      %s78 = sphi 0, %s77
      %s92 = sphi 0, %s78
      %s96 = sphi 0, %s96
      %s98 = sphi 0, %s96
      %s99 = sphi 0, %s98
      %s113 = sphi 0, %s99
      %s117 = sphi 0, %s117
      %s119 = sphi 0, %s117
      %s120 = sphi 0, %s119
      %s134 = sphi 0, %s120
      %s138 = sphi 0, %s138
      %s140 = sphi 0, %s138
      %s141 = sphi 0, %s140
      %s155 = sphi 0, %s141
      %s159 = sphi 0, %s159
      %s161 = sphi 0, %s159
      %s162 = sphi 0, %s161
      %s176 = sphi 0, %s162
      %s180 = sphi 0, %s180
      %s182 = sphi 0, %s180
      %s183 = sphi 0, %s182
      %s197 = sphi 0, %s183
      %s201 = sphi 0, %s201
      %s203 = sphi 0, %s201
      %s204 = sphi 0, %s203
      %s218 = sphi 0, %s204
      %s224 = sphi 0, %s226
      %s227 = sphi 0, %s224
      %s228 = sphi 0, %s227
      %s244 = sphi 0, %s228
    $region4: #{tpu_custom_call.1} parent=1 // loop_header_branch
      %23 = sbr.rel (%p21) target = $region8
    $region5: #{tpu_custom_call.1} parent=1 // loop_body
      %s25 = ssub.s32 %s20, 1
      %s26 = ssub.s32 %s20, 2
      %s27 = sadd.s32 %s20, 1
      %s28 = ssub.s32 %s20, %s27
      %p29 = scmp.eq.s32.totalorder %s28, 0
      %s31 = sadd.s32 %s30, 1
      %s32 = scalar_select %p29, %s30, %s31
      %p35 = pneg %p29
      %p36 = scmp.eq.s32.totalorder %s20, 1
      %p37 = por %p35, %p36
      %p38 = scmp.ne.s32.totalorder %s30, %s33
      %p39 = scmp.eq.s32.totalorder %s20, 0
      %p40 = por %p38, %p39
      %p41 = scmp.ne.s32.totalorder %s30, %s33
      %p42 = scmp.eq.s32.totalorder %s25, 1
      %p43 = por %p41, %p42
      %p44 = scmp.ne.s32.totalorder %s33, %s34
      %p45 = scmp.eq.s32.totalorder %s25, 0
      %p46 = por %p44, %p45
      %p47 = scmp.ne.s32.totalorder %s33, %s34
      %p48 = scmp.eq.s32.totalorder %s26, 1
      %p49 = por %p47, %p48
      %p51 = scmp.ne.s32.totalorder %s34, %s50
      %p52 = scmp.eq.s32.totalorder %s26, 0
      %p53 = por %p51, %p52
      %s55 = sadd.s32 %s54, 1
      %p58 = scmp.eq.s32.totalorder %s20, 1
      %p59 = scmp.ne.s32.totalorder %s54, %s56
      %p60 = scmp.eq.s32.totalorder %s20, 0
      %p61 = por %p59, %p60
      %p62 = scmp.ne.s32.totalorder %s54, %s56
      %p63 = scmp.eq.s32.totalorder %s25, 1
      %p64 = por %p62, %p63
      %p65 = scmp.ne.s32.totalorder %s56, %s57
      %p66 = scmp.eq.s32.totalorder %s25, 0
      %p67 = por %p65, %p66
      %p68 = scmp.ne.s32.totalorder %s56, %s57
      %p69 = scmp.eq.s32.totalorder %s26, 1
      %p70 = por %p68, %p69
      %p72 = scmp.ne.s32.totalorder %s57, %s71
      %p73 = scmp.eq.s32.totalorder %s26, 0
      %p74 = por %p72, %p73
      %s76 = sadd.s32 %s75, 1
      %p79 = scmp.eq.s32.totalorder %s20, 1
      %p80 = scmp.ne.s32.totalorder %s75, %s77
      %p81 = scmp.eq.s32.totalorder %s20, 0
      %p82 = por %p80, %p81
      %p83 = scmp.ne.s32.totalorder %s75, %s77
      %p84 = scmp.eq.s32.totalorder %s25, 1
      %p85 = por %p83, %p84
      %p86 = scmp.ne.s32.totalorder %s77, %s78
      %p87 = scmp.eq.s32.totalorder %s25, 0
      %p88 = por %p86, %p87
      %p89 = scmp.ne.s32.totalorder %s77, %s78
      %p90 = scmp.eq.s32.totalorder %s26, 1
      %p91 = por %p89, %p90
      %p93 = scmp.ne.s32.totalorder %s78, %s92
      %p94 = scmp.eq.s32.totalorder %s26, 0
      %p95 = por %p93, %p94
      %s97 = sadd.s32 %s96, 1
      %p100 = scmp.eq.s32.totalorder %s20, 1
      %p101 = scmp.ne.s32.totalorder %s96, %s98
      %p102 = scmp.eq.s32.totalorder %s20, 0
      %p103 = por %p101, %p102
      %p104 = scmp.ne.s32.totalorder %s96, %s98
      %p105 = scmp.eq.s32.totalorder %s25, 1
      %p106 = por %p104, %p105
      %p107 = scmp.ne.s32.totalorder %s98, %s99
      %p108 = scmp.eq.s32.totalorder %s25, 0
      %p109 = por %p107, %p108
      %p110 = scmp.ne.s32.totalorder %s98, %s99
      %p111 = scmp.eq.s32.totalorder %s26, 1
      %p112 = por %p110, %p111
      %p114 = scmp.ne.s32.totalorder %s99, %s113
      %p115 = scmp.eq.s32.totalorder %s26, 0
      %p116 = por %p114, %p115
      %s118 = sadd.s32 %s117, 1
      %p121 = scmp.eq.s32.totalorder %s20, 1
      %p122 = scmp.ne.s32.totalorder %s117, %s119
      %p123 = scmp.eq.s32.totalorder %s20, 0
      %p124 = por %p122, %p123
      %p125 = scmp.ne.s32.totalorder %s117, %s119
      %p126 = scmp.eq.s32.totalorder %s25, 1
      %p127 = por %p125, %p126
      %p128 = scmp.ne.s32.totalorder %s119, %s120
      %p129 = scmp.eq.s32.totalorder %s25, 0
      %p130 = por %p128, %p129
      %p131 = scmp.ne.s32.totalorder %s119, %s120
      %p132 = scmp.eq.s32.totalorder %s26, 1
      %p133 = por %p131, %p132
      %p135 = scmp.ne.s32.totalorder %s120, %s134
      %p136 = scmp.eq.s32.totalorder %s26, 0
      %p137 = por %p135, %p136
      %s139 = sadd.s32 %s138, 1
      %p142 = scmp.eq.s32.totalorder %s20, 1
      %p143 = scmp.ne.s32.totalorder %s138, %s140
      %p144 = scmp.eq.s32.totalorder %s20, 0
      %p145 = por %p143, %p144
      %p146 = scmp.ne.s32.totalorder %s138, %s140
      %p147 = scmp.eq.s32.totalorder %s25, 1
      %p148 = por %p146, %p147
      %p149 = scmp.ne.s32.totalorder %s140, %s141
      %p150 = scmp.eq.s32.totalorder %s25, 0
      %p151 = por %p149, %p150
      %p152 = scmp.ne.s32.totalorder %s140, %s141
      %p153 = scmp.eq.s32.totalorder %s26, 1
      %p154 = por %p152, %p153
      %p156 = scmp.ne.s32.totalorder %s141, %s155
      %p157 = scmp.eq.s32.totalorder %s26, 0
      %p158 = por %p156, %p157
      %s160 = sadd.s32 %s159, 1
      %p163 = scmp.eq.s32.totalorder %s20, 1
      %p164 = scmp.ne.s32.totalorder %s159, %s161
      %p165 = scmp.eq.s32.totalorder %s20, 0
      %p166 = por %p164, %p165
      %p167 = scmp.ne.s32.totalorder %s159, %s161
      %p168 = scmp.eq.s32.totalorder %s25, 1
      %p169 = por %p167, %p168
      %p170 = scmp.ne.s32.totalorder %s161, %s162
      %p171 = scmp.eq.s32.totalorder %s25, 0
      %p172 = por %p170, %p171
      %p173 = scmp.ne.s32.totalorder %s161, %s162
      %p174 = scmp.eq.s32.totalorder %s26, 1
      %p175 = por %p173, %p174
      %p177 = scmp.ne.s32.totalorder %s162, %s176
      %p178 = scmp.eq.s32.totalorder %s26, 0
      %p179 = por %p177, %p178
      %s181 = sadd.s32 %s180, 1
      %p184 = scmp.eq.s32.totalorder %s20, 1
      %p185 = scmp.ne.s32.totalorder %s180, %s182
      %p186 = scmp.eq.s32.totalorder %s20, 0
      %p187 = por %p185, %p186
      %p188 = scmp.ne.s32.totalorder %s180, %s182
      %p189 = scmp.eq.s32.totalorder %s25, 1
      %p190 = por %p188, %p189
      %p191 = scmp.ne.s32.totalorder %s182, %s183
      %p192 = scmp.eq.s32.totalorder %s25, 0
      %p193 = por %p191, %p192
      %p194 = scmp.ne.s32.totalorder %s182, %s183
      %p195 = scmp.eq.s32.totalorder %s26, 1
      %p196 = por %p194, %p195
      %p198 = scmp.ne.s32.totalorder %s183, %s197
      %p199 = scmp.eq.s32.totalorder %s26, 0
      %p200 = por %p198, %p199
      %s202 = sadd.s32 %s201, 1
      %p205 = scmp.eq.s32.totalorder %s20, 1
      %p206 = scmp.ne.s32.totalorder %s201, %s203
      %p207 = scmp.eq.s32.totalorder %s20, 0
      %p208 = por %p206, %p207
      %p209 = scmp.ne.s32.totalorder %s201, %s203
      %p210 = scmp.eq.s32.totalorder %s25, 1
      %p211 = por %p209, %p210
      %p212 = scmp.ne.s32.totalorder %s203, %s204
      %p213 = scmp.eq.s32.totalorder %s25, 0
      %p214 = por %p212, %p213
      %p215 = scmp.ne.s32.totalorder %s203, %s204
      %p216 = scmp.eq.s32.totalorder %s26, 1
      %p217 = por %p215, %p216
      %p219 = scmp.ne.s32.totalorder %s204, %s218
      %p220 = scmp.eq.s32.totalorder %s26, 0
      %p221 = por %p219, %p220
      %s222 = ssub.s32 %s20, %s27
      %p223 = scmp.eq.s32.totalorder %s222, 0
      %s225 = sadd.s32 %s224, 1
      %s226 = scalar_select %p223, %s224, %s225
      %p229 = pneg %p223
      %p230 = scmp.eq.s32.totalorder %s20, 1
      %p231 = por %p229, %p230
      %p232 = scmp.ne.s32.totalorder %s224, %s227
      %p233 = scmp.eq.s32.totalorder %s20, 0
      %p234 = por %p232, %p233
      %p235 = scmp.ne.s32.totalorder %s224, %s227
      %p236 = scmp.eq.s32.totalorder %s25, 1
      %p237 = por %p235, %p236
      %p238 = scmp.ne.s32.totalorder %s227, %s228
      %p239 = scmp.eq.s32.totalorder %s25, 0
      %p240 = por %p238, %p239
      %p241 = scmp.ne.s32.totalorder %s227, %s228
      %p242 = scmp.eq.s32.totalorder %s26, 1
      %p243 = por %p241, %p242
      %p245 = scmp.ne.s32.totalorder %s228, %s244
      %p246 = scmp.eq.s32.totalorder %s26, 0
      %p247 = por %p245, %p246
      %p248 = scmp.le.s32.totalorder 1, %s20
      %p249 = scmp.lt.s32.totalorder %s20, 3
      %p250 = pnand %p248, %p249
      %p251 = pneg %p250
      // Predicated region
      $region9: #{tpu_custom_call.1} parent=5 // pred_check
        _
      $region10: #{tpu_custom_call.1} parent=5 // pred_check_branch
        %253 = sbr.rel (%p250) target = $region12
      $region11: #{tpu_custom_call.1} parent=5 // pred_region
        %s254 = ssub.s32 %s20, 1
        // Predicated region
        $region13: #{tpu_custom_call.1} parent=11 // pred_check
          %p255 = pneg %p67
        $region14: #{tpu_custom_call.1} parent=11 // pred_check_branch
          %257 = sbr.rel (%p255) target = $region16
        $region15: #{tpu_custom_call.1} parent=11 // pred_region
          _
        $region16: #{tpu_custom_call.1} parent=11 // pred_fallthru
          _
        // Predicated region
        $region17: #{tpu_custom_call.1} parent=11 // pred_check
          %p258 = pneg %p88
        $region18: #{tpu_custom_call.1} parent=11 // pred_check_branch
          %260 = sbr.rel (%p258) target = $region20
        $region19: #{tpu_custom_call.1} parent=11 // pred_region
          _
        $region20: #{tpu_custom_call.1} parent=11 // pred_fallthru
          _
        // Predicated region
        $region21: #{tpu_custom_call.1} parent=11 // pred_check
          %p261 = pneg %p109
        $region22: #{tpu_custom_call.1} parent=11 // pred_check_branch
          %263 = sbr.rel (%p261) target = $region24
        $region23: #{tpu_custom_call.1} parent=11 // pred_region
          _
        $region24: #{tpu_custom_call.1} parent=11 // pred_fallthru
          _
        // Predicated region
        $region25: #{tpu_custom_call.1} parent=11 // pred_check
          %p264 = pneg %p130
        $region26: #{tpu_custom_call.1} parent=11 // pred_check_branch
          %266 = sbr.rel (%p264) target = $region28
        $region27: #{tpu_custom_call.1} parent=11 // pred_region
          _
        $region28: #{tpu_custom_call.1} parent=11 // pred_fallthru
          _
        // Predicated region
        $region29: #{tpu_custom_call.1} parent=11 // pred_check
          %p267 = pneg %p151
        $region30: #{tpu_custom_call.1} parent=11 // pred_check_branch
          %269 = sbr.rel (%p267) target = $region32
        $region31: #{tpu_custom_call.1} parent=11 // pred_region
          %271 = vsyncadd [#allocation4], 0
          %s272 = sshll.u32 %s5, 4
          %s273 = int_to_ptr.hbm [resolvable:$true] %s272
          %s274 = sshll.u32 [#allocation3], 4
          %s275 = int_to_ptr.vmem [resolvable:$true] %s274
          %280 = dma.hbm_to_vmem [thread:$0]  %s273, 12288, %s275, [#allocation4], 384, 384, 24
        $region32: #{tpu_custom_call.1} parent=11 // pred_fallthru
          _
        // Predicated region
        $region33: #{tpu_custom_call.1} parent=11 // pred_check
          %p281 = pneg %p172
        $region34: #{tpu_custom_call.1} parent=11 // pred_check_branch
          %283 = sbr.rel (%p281) target = $region36
        $region35: #{tpu_custom_call.1} parent=11 // pred_region
          _
        $region36: #{tpu_custom_call.1} parent=11 // pred_fallthru
          _
        // Predicated region
        $region37: #{tpu_custom_call.1} parent=11 // pred_check
          %p284 = pneg %p193
        $region38: #{tpu_custom_call.1} parent=11 // pred_check_branch
          %286 = sbr.rel (%p284) target = $region40
        $region39: #{tpu_custom_call.1} parent=11 // pred_region
          _
        $region40: #{tpu_custom_call.1} parent=11 // pred_fallthru
          _
        // Predicated region
        $region41: #{tpu_custom_call.1} parent=11 // pred_check
          %p287 = pneg %p214
        $region42: #{tpu_custom_call.1} parent=11 // pred_check_branch
          %289 = sbr.rel (%p287) target = $region44
        $region43: #{tpu_custom_call.1} parent=11 // pred_region
          _
        $region44: #{tpu_custom_call.1} parent=11 // pred_fallthru
          _
      $region12: #{tpu_custom_call.1} parent=5 // pred_fallthru
        _
      %p290 = scmp.lt.s32.totalorder %s20, 2
      // Predicated region
      $region45: #{tpu_custom_call.1} parent=5 // pred_check
        %p291 = pneg %p290
      $region46: #{tpu_custom_call.1} parent=5 // pred_check_branch
        %293 = sbr.rel (%p291) target = $region48
      $region47: #{tpu_custom_call.1} parent=5 // pred_region
        // Predicated region
        $region49: #{tpu_custom_call.1} parent=47 // pred_check
          %p294 = pneg %p40
        $region50: #{tpu_custom_call.1} parent=47 // pred_check_branch
          %296 = sbr.rel (%p294) target = $region52
        $region51: #{tpu_custom_call.1} parent=47 // pred_region
          %p297 = scmp.lt.s32.totalorder %s20, 1
          %s298 = scalar_select %p297, %s20, 1
          %s299 = scalar_lea.vmem %s0, %s298
        $region52: #{tpu_custom_call.1} parent=47 // pred_fallthru
          _
      $region48: #{tpu_custom_call.1} parent=5 // pred_fallthru
        _
      %p300 = scmp.le.s32.totalorder 1, %s20
      %p301 = scmp.lt.s32.totalorder %s20, 3
      %p302 = pnand %p300, %p301
      %p303 = pneg %p302
      // Predicated region
      $region53: #{tpu_custom_call.1} parent=5 // pred_check
        _
      $region54: #{tpu_custom_call.1} parent=5 // pred_check_branch
        %305 = sbr.rel (%p302) target = $region56
      $region55: #{tpu_custom_call.1} parent=5 // pred_region
        %s306 = ssub.s32 %s20, 1
        // Predicated region
        $region57: #{tpu_custom_call.1} parent=55 // pred_check
          %p307 = pneg %p151
        $region58: #{tpu_custom_call.1} parent=55 // pred_check_branch
          %309 = sbr.rel (%p307) target = $region60
        $region59: #{tpu_custom_call.1} parent=55 // pred_region
          %311 = dma.done [#allocation4], 12288
        $region60: #{tpu_custom_call.1} parent=55 // pred_fallthru
          _
        %p312 = scmp.lt.s32.totalorder %s25, 1
        %s313 = scalar_select %p312, %s25, 1
        %s314 = scalar_lea.vmem %s0, %s313
        %p315 = pneg %p46
        %p316 = pneg %p43
        %p317 = pneg %p67
        %p318 = pneg %p64
        %p319 = pneg %p88
        %p320 = pneg %p85
        %p321 = pneg %p109
        %p322 = pneg %p106
        %p323 = pneg %p130
        %p324 = pneg %p127
        %p325 = pneg %p151
        %p326 = pneg %p148
        %p327 = pneg %p172
        %p328 = pneg %p169
        %p329 = pneg %p193
        %p330 = pneg %p190
        %p331 = pneg %p214
        %p332 = pneg %p211
        %p333 = pneg %p240
        %p334 = pneg %p237
        %s335 = sand.u32 %s227, 1
        %s336 = scalar_lea.sflag [#allocation5], %s335
        %s337 = sand.u32 %s227, 1
        %s338 = scalar_lea.vmem [#allocation6], %s337
        %p339 = scmp.lt.s32.totalorder %s25, 1
        %s340 = scalar_select %p339, %s25, 1
        %s341 = scalar_lea.vmem %s0, %s340
        %v342 = vld [vmem:[%s1] sm:$0x1]
        %v343 = vld [vmem:[%s2] sm:$0x1]
        %v344 = vld [vmem:[%s341] sm:$0x1]
        %345 = vrot.lane.b32.xlu0 %v344, 1
        %v346 = vpop.permute.xlu0 %345
        %v347 = vmul.f32 %v346, %v342
        %348 = vrot.lane.b32.xlu0 %v344, 127
        %v349 = vpop.permute.xlu0 %348
        %v350 = vmul.f32 %v349, %v343
        %v351 = vld [vmem:[%s3] sm:$0xff]
        %v352 = vld [vmem:[%s3 + $0x8] sm:$0xff]
        %v353 = vld [vmem:[%s3 + $0x10] sm:$0xff]
        %v354 = vld [vmem:[%s3 + $0x18] sm:$0xff]
        %v355 = vld [vmem:[%s3 + $0x20] sm:$0xff]
        %v356 = vld [vmem:[%s3 + $0x28] sm:$0xff]
        %v357 = vld [vmem:[%s3 + $0x30] sm:$0xff]
        %v358 = vld [vmem:[%s3 + $0x38] sm:$0xff]
        %v359 = vld [vmem:[%s3 + $0x40] sm:$0xff]
        %v360 = vld [vmem:[%s3 + $0x48] sm:$0xff]
        %v361 = vld [vmem:[%s3 + $0x50] sm:$0xff]
        %v362 = vld [vmem:[%s3 + $0x58] sm:$0xff]
        %v363 = vld [vmem:[%s3 + $0x60] sm:$0xff]
        %v364 = vld [vmem:[%s3 + $0x68] sm:$0xff]
        %v365 = vld [vmem:[%s3 + $0x70] sm:$0xff]
        %v366 = vld [vmem:[%s3 + $0x78] sm:$0xff]
        %368 = vset.pattern.permute.xlu0 0
        %369 = vperm.xlu0 %368, %v351
        %v370 = vpop.permute.xlu0 %369
        %373 = vset.pattern.permute.xlu0 0
        %374 = vperm.xlu0 %373, %v352
        %v375 = vpop.permute.xlu0 %374
        %378 = vset.pattern.permute.xlu0 0
        %379 = vperm.xlu0 %378, %v353
        %v380 = vpop.permute.xlu0 %379
        %383 = vset.pattern.permute.xlu0 0
        %384 = vperm.xlu0 %383, %v354
        %v385 = vpop.permute.xlu0 %384
        %388 = vset.pattern.permute.xlu0 0
        %389 = vperm.xlu0 %388, %v355
        %v390 = vpop.permute.xlu0 %389
        %393 = vset.pattern.permute.xlu0 0
        %394 = vperm.xlu0 %393, %v356
        %v395 = vpop.permute.xlu0 %394
        %398 = vset.pattern.permute.xlu0 0
        %399 = vperm.xlu0 %398, %v357
        %v400 = vpop.permute.xlu0 %399
        %403 = vset.pattern.permute.xlu0 0
        %404 = vperm.xlu0 %403, %v358
        %v405 = vpop.permute.xlu0 %404
        %408 = vset.pattern.permute.xlu0 0
        %409 = vperm.xlu0 %408, %v359
        %v410 = vpop.permute.xlu0 %409
        %413 = vset.pattern.permute.xlu0 0
        %414 = vperm.xlu0 %413, %v360
        %v415 = vpop.permute.xlu0 %414
        %418 = vset.pattern.permute.xlu0 0
        %419 = vperm.xlu0 %418, %v361
        %v420 = vpop.permute.xlu0 %419
        %423 = vset.pattern.permute.xlu0 0
        %424 = vperm.xlu0 %423, %v362
        %v425 = vpop.permute.xlu0 %424
        %428 = vset.pattern.permute.xlu0 0
        %429 = vperm.xlu0 %428, %v363
        %v430 = vpop.permute.xlu0 %429
        %433 = vset.pattern.permute.xlu0 0
        %434 = vperm.xlu0 %433, %v364
        %v435 = vpop.permute.xlu0 %434
        %438 = vset.pattern.permute.xlu0 0
        %439 = vperm.xlu0 %438, %v365
        %v440 = vpop.permute.xlu0 %439
        %443 = vset.pattern.permute.xlu0 0
        %444 = vperm.xlu0 %443, %v366
        %v445 = vpop.permute.xlu0 %444
        %v447 = vperm.slane %v347, 0
        %v448 = vmul.f32 %v370, %v447
        %v449 = vmul.f32 %v375, %v447
        %v450 = vmul.f32 %v380, %v447
        %v451 = vmul.f32 %v385, %v447
        %v452 = vmul.f32 %v390, %v447
        %v453 = vmul.f32 %v395, %v447
        %v454 = vmul.f32 %v400, %v447
        %v455 = vmul.f32 %v405, %v447
        %v456 = vmul.f32 %v410, %v447
        %v457 = vmul.f32 %v415, %v447
        %v458 = vmul.f32 %v420, %v447
        %v459 = vmul.f32 %v425, %v447
        %v460 = vmul.f32 %v430, %v447
        %v461 = vmul.f32 %v435, %v447
        %v462 = vmul.f32 %v440, %v447
        %v463 = vmul.f32 %v445, %v447
        %464 = vset.pattern.permute.xlu0 1
        %465 = vperm.xlu0 %464, %v351
        %v466 = vpop.permute.xlu0 %465
        %468 = vset.pattern.permute.xlu0 1
        %469 = vperm.xlu0 %468, %v352
        %v470 = vpop.permute.xlu0 %469
        %472 = vset.pattern.permute.xlu0 1
        %473 = vperm.xlu0 %472, %v353
        %v474 = vpop.permute.xlu0 %473
        %476 = vset.pattern.permute.xlu0 1
        %477 = vperm.xlu0 %476, %v354
        %v478 = vpop.permute.xlu0 %477
        %480 = vset.pattern.permute.xlu0 1
        %481 = vperm.xlu0 %480, %v355
        %v482 = vpop.permute.xlu0 %481
        %484 = vset.pattern.permute.xlu0 1
        %485 = vperm.xlu0 %484, %v356
        %v486 = vpop.permute.xlu0 %485
        %488 = vset.pattern.permute.xlu0 1
        %489 = vperm.xlu0 %488, %v357
        %v490 = vpop.permute.xlu0 %489
        %492 = vset.pattern.permute.xlu0 1
        %493 = vperm.xlu0 %492, %v358
        %v494 = vpop.permute.xlu0 %493
        %496 = vset.pattern.permute.xlu0 1
        %497 = vperm.xlu0 %496, %v359
        %v498 = vpop.permute.xlu0 %497
        %500 = vset.pattern.permute.xlu0 1
        %501 = vperm.xlu0 %500, %v360
        %v502 = vpop.permute.xlu0 %501
        %504 = vset.pattern.permute.xlu0 1
        %505 = vperm.xlu0 %504, %v361
        %v506 = vpop.permute.xlu0 %505
        %508 = vset.pattern.permute.xlu0 1
        %509 = vperm.xlu0 %508, %v362
        %v510 = vpop.permute.xlu0 %509
        %512 = vset.pattern.permute.xlu0 1
        %513 = vperm.xlu0 %512, %v363
        %v514 = vpop.permute.xlu0 %513
        %516 = vset.pattern.permute.xlu0 1
        %517 = vperm.xlu0 %516, %v364
        %v518 = vpop.permute.xlu0 %517
        %520 = vset.pattern.permute.xlu0 1
        %521 = vperm.xlu0 %520, %v365
        %v522 = vpop.permute.xlu0 %521
        %524 = vset.pattern.permute.xlu0 1
        %525 = vperm.xlu0 %524, %v366
        %v526 = vpop.permute.xlu0 %525
        %v529 = vperm.slane %v344, 0
        %v531 = vmul.f32 %v466, %v529
        %v532 = vmul.f32 %v470, %v529
        %v533 = vmul.f32 %v474, %v529
        %v534 = vmul.f32 %v478, %v529
        %v535 = vmul.f32 %v482, %v529
        %v536 = vmul.f32 %v486, %v529
        %v537 = vmul.f32 %v490, %v529
        %v538 = vmul.f32 %v494, %v529
        %v539 = vmul.f32 %v498, %v529
        %v540 = vmul.f32 %v502, %v529
        %v541 = vmul.f32 %v506, %v529
        %v542 = vmul.f32 %v510, %v529
        %v543 = vmul.f32 %v514, %v529
        %v544 = vmul.f32 %v518, %v529
        %v545 = vmul.f32 %v522, %v529
        %v546 = vmul.f32 %v526, %v529
        %v547 = vadd.f32 %v448, %v531
        %v548 = vadd.f32 %v449, %v532
        %v549 = vadd.f32 %v450, %v533
        %v550 = vadd.f32 %v451, %v534
        %v551 = vadd.f32 %v452, %v535
        %v552 = vadd.f32 %v453, %v536
        %v553 = vadd.f32 %v454, %v537
        %v554 = vadd.f32 %v455, %v538
        %v555 = vadd.f32 %v456, %v539
        %v556 = vadd.f32 %v457, %v540
        %v557 = vadd.f32 %v458, %v541
        %v558 = vadd.f32 %v459, %v542
        %v559 = vadd.f32 %v460, %v543
        %v560 = vadd.f32 %v461, %v544
        %v561 = vadd.f32 %v462, %v545
        %v562 = vadd.f32 %v463, %v546
        %563 = vset.pattern.permute.xlu0 2
        %564 = vperm.xlu0 %563, %v351
        %v565 = vpop.permute.xlu0 %564
        %567 = vset.pattern.permute.xlu0 2
        %568 = vperm.xlu0 %567, %v352
        %v569 = vpop.permute.xlu0 %568
        %571 = vset.pattern.permute.xlu0 2
        %572 = vperm.xlu0 %571, %v353
        %v573 = vpop.permute.xlu0 %572
        %575 = vset.pattern.permute.xlu0 2
        %576 = vperm.xlu0 %575, %v354
        %v577 = vpop.permute.xlu0 %576
        %579 = vset.pattern.permute.xlu0 2
        %580 = vperm.xlu0 %579, %v355
        %v581 = vpop.permute.xlu0 %580
        %583 = vset.pattern.permute.xlu0 2
        %584 = vperm.xlu0 %583, %v356
        %v585 = vpop.permute.xlu0 %584
        %587 = vset.pattern.permute.xlu0 2
        %588 = vperm.xlu0 %587, %v357
        %v589 = vpop.permute.xlu0 %588
        %591 = vset.pattern.permute.xlu0 2
        %592 = vperm.xlu0 %591, %v358
        %v593 = vpop.permute.xlu0 %592
        %595 = vset.pattern.permute.xlu0 2
        %596 = vperm.xlu0 %595, %v359
        %v597 = vpop.permute.xlu0 %596
        %599 = vset.pattern.permute.xlu0 2
        %600 = vperm.xlu0 %599, %v360
        %v601 = vpop.permute.xlu0 %600
        %603 = vset.pattern.permute.xlu0 2
        %604 = vperm.xlu0 %603, %v361
        %v605 = vpop.permute.xlu0 %604
        %607 = vset.pattern.permute.xlu0 2
        %608 = vperm.xlu0 %607, %v362
        %v609 = vpop.permute.xlu0 %608
        %611 = vset.pattern.permute.xlu0 2
        %612 = vperm.xlu0 %611, %v363
        %v613 = vpop.permute.xlu0 %612
        %615 = vset.pattern.permute.xlu0 2
        %616 = vperm.xlu0 %615, %v364
        %v617 = vpop.permute.xlu0 %616
        %619 = vset.pattern.permute.xlu0 2
        %620 = vperm.xlu0 %619, %v365
        %v621 = vpop.permute.xlu0 %620
        %623 = vset.pattern.permute.xlu0 2
        %624 = vperm.xlu0 %623, %v366
        %v625 = vpop.permute.xlu0 %624
        %v627 = vperm.slane %v350, 0
        %v628 = vmul.f32 %v565, %v627
        %v629 = vmul.f32 %v569, %v627
        %v630 = vmul.f32 %v573, %v627
        %v631 = vmul.f32 %v577, %v627
        %v632 = vmul.f32 %v581, %v627
        %v633 = vmul.f32 %v585, %v627
        %v634 = vmul.f32 %v589, %v627
        %v635 = vmul.f32 %v593, %v627
        %v636 = vmul.f32 %v597, %v627
        %v637 = vmul.f32 %v601, %v627
        %v638 = vmul.f32 %v605, %v627
        %v639 = vmul.f32 %v609, %v627
        %v640 = vmul.f32 %v613, %v627
        %v641 = vmul.f32 %v617, %v627
        %v642 = vmul.f32 %v621, %v627
        %v643 = vmul.f32 %v625, %v627
        %v644 = vadd.f32 %v547, %v628
        %v645 = vadd.f32 %v548, %v629
        %v646 = vadd.f32 %v549, %v630
        %v647 = vadd.f32 %v550, %v631
        %v648 = vadd.f32 %v551, %v632
        %v649 = vadd.f32 %v552, %v633
        %v650 = vadd.f32 %v553, %v634
        %v651 = vadd.f32 %v554, %v635
        %v652 = vadd.f32 %v555, %v636
        %v653 = vadd.f32 %v556, %v637
        %v654 = vadd.f32 %v557, %v638
        %v655 = vadd.f32 %v558, %v639
        %v656 = vadd.f32 %v559, %v640
        %v657 = vadd.f32 %v560, %v641
        %v658 = vadd.f32 %v561, %v642
        %v659 = vadd.f32 %v562, %v643
        %v660 = vld [vmem:[%s4] sm:$0xff]
        %v661 = vld [vmem:[%s4 + $0x8] sm:$0xff]
        %v662 = vld [vmem:[%s4 + $0x10] sm:$0xff]
        %v663 = vld [vmem:[%s4 + $0x18] sm:$0xff]
        %v664 = vld [vmem:[%s4 + $0x20] sm:$0xff]
        %v665 = vld [vmem:[%s4 + $0x28] sm:$0xff]
        %v666 = vld [vmem:[%s4 + $0x30] sm:$0xff]
        %v667 = vld [vmem:[%s4 + $0x38] sm:$0xff]
        %v668 = vld [vmem:[%s4 + $0x40] sm:$0xff]
        %v669 = vld [vmem:[%s4 + $0x48] sm:$0xff]
        %v670 = vld [vmem:[%s4 + $0x50] sm:$0xff]
        %v671 = vld [vmem:[%s4 + $0x58] sm:$0xff]
        %v672 = vld [vmem:[%s4 + $0x60] sm:$0xff]
        %v673 = vld [vmem:[%s4 + $0x68] sm:$0xff]
        %v674 = vld [vmem:[%s4 + $0x70] sm:$0xff]
        %v675 = vld [vmem:[%s4 + $0x78] sm:$0xff]
        %677 = vset.pattern.permute.xlu0 0
        %678 = vperm.xlu0 %677, %v660
        %v679 = vpop.permute.xlu0 %678
        %682 = vset.pattern.permute.xlu0 0
        %683 = vperm.xlu0 %682, %v661
        %v684 = vpop.permute.xlu0 %683
        %687 = vset.pattern.permute.xlu0 0
        %688 = vperm.xlu0 %687, %v662
        %v689 = vpop.permute.xlu0 %688
        %692 = vset.pattern.permute.xlu0 0
        %693 = vperm.xlu0 %692, %v663
        %v694 = vpop.permute.xlu0 %693
        %697 = vset.pattern.permute.xlu0 0
        %698 = vperm.xlu0 %697, %v664
        %v699 = vpop.permute.xlu0 %698
        %702 = vset.pattern.permute.xlu0 0
        %703 = vperm.xlu0 %702, %v665
        %v704 = vpop.permute.xlu0 %703
        %707 = vset.pattern.permute.xlu0 0
        %708 = vperm.xlu0 %707, %v666
        %v709 = vpop.permute.xlu0 %708
        %712 = vset.pattern.permute.xlu0 0
        %713 = vperm.xlu0 %712, %v667
        %v714 = vpop.permute.xlu0 %713
        %717 = vset.pattern.permute.xlu0 0
        %718 = vperm.xlu0 %717, %v668
        %v719 = vpop.permute.xlu0 %718
        %722 = vset.pattern.permute.xlu0 0
        %723 = vperm.xlu0 %722, %v669
        %v724 = vpop.permute.xlu0 %723
        %727 = vset.pattern.permute.xlu0 0
        %728 = vperm.xlu0 %727, %v670
        %v729 = vpop.permute.xlu0 %728
        %732 = vset.pattern.permute.xlu0 0
        %733 = vperm.xlu0 %732, %v671
        %v734 = vpop.permute.xlu0 %733
        %737 = vset.pattern.permute.xlu0 0
        %738 = vperm.xlu0 %737, %v672
        %v739 = vpop.permute.xlu0 %738
        %742 = vset.pattern.permute.xlu0 0
        %743 = vperm.xlu0 %742, %v673
        %v744 = vpop.permute.xlu0 %743
        %747 = vset.pattern.permute.xlu0 0
        %748 = vperm.xlu0 %747, %v674
        %v749 = vpop.permute.xlu0 %748
        %752 = vset.pattern.permute.xlu0 0
        %753 = vperm.xlu0 %752, %v675
        %v754 = vpop.permute.xlu0 %753
        %v756 = vadd.f32 %v644, %v679
        %v757 = vadd.f32 %v645, %v684
        %v758 = vadd.f32 %v646, %v689
        %v759 = vadd.f32 %v647, %v694
        %v760 = vadd.f32 %v648, %v699
        %v761 = vadd.f32 %v649, %v704
        %v762 = vadd.f32 %v650, %v709
        %v763 = vadd.f32 %v651, %v714
        %v764 = vadd.f32 %v652, %v719
        %v765 = vadd.f32 %v653, %v724
        %v766 = vadd.f32 %v654, %v729
        %v767 = vadd.f32 %v655, %v734
        %v768 = vadd.f32 %v656, %v739
        %v769 = vadd.f32 %v657, %v744
        %v770 = vadd.f32 %v658, %v749
        %v771 = vadd.f32 %v659, %v754
        %vm772 = vcmp.ge.f32.partialorder %v756, 0.0
        %vm773 = vcmp.ge.f32.partialorder %v757, 0.0
        %vm774 = vcmp.ge.f32.partialorder %v758, 0.0
        %vm775 = vcmp.ge.f32.partialorder %v759, 0.0
        %vm776 = vcmp.ge.f32.partialorder %v760, 0.0
        %vm777 = vcmp.ge.f32.partialorder %v761, 0.0
        %vm778 = vcmp.ge.f32.partialorder %v762, 0.0
        %vm779 = vcmp.ge.f32.partialorder %v763, 0.0
        %vm780 = vcmp.ge.f32.partialorder %v764, 0.0
        %vm781 = vcmp.ge.f32.partialorder %v765, 0.0
        %vm782 = vcmp.ge.f32.partialorder %v766, 0.0
        %vm783 = vcmp.ge.f32.partialorder %v767, 0.0
        %vm784 = vcmp.ge.f32.partialorder %v768, 0.0
        %vm785 = vcmp.ge.f32.partialorder %v769, 0.0
        %vm786 = vcmp.ge.f32.partialorder %v770, 0.0
        %vm787 = vcmp.ge.f32.partialorder %v771, 0.0
        %v788 = vmul.f32 %v756, 0.2
        %v789 = vmul.f32 %v757, 0.2
        %v790 = vmul.f32 %v758, 0.2
        %v791 = vmul.f32 %v759, 0.2
        %v792 = vmul.f32 %v760, 0.2
        %v793 = vmul.f32 %v761, 0.2
        %v794 = vmul.f32 %v762, 0.2
        %v795 = vmul.f32 %v763, 0.2
        %v796 = vmul.f32 %v764, 0.2
        %v797 = vmul.f32 %v765, 0.2
        %v798 = vmul.f32 %v766, 0.2
        %v799 = vmul.f32 %v767, 0.2
        %v800 = vmul.f32 %v768, 0.2
        %v801 = vmul.f32 %v769, 0.2
        %v802 = vmul.f32 %v770, 0.2
        %v803 = vmul.f32 %v771, 0.2
        %v804 = vsel %vm772, %v756, %v788
        %v805 = vsel %vm773, %v757, %v789
        %v806 = vsel %vm774, %v758, %v790
        %v807 = vsel %vm775, %v759, %v791
        %v808 = vsel %vm776, %v760, %v792
        %v809 = vsel %vm777, %v761, %v793
        %v810 = vsel %vm778, %v762, %v794
        %v811 = vsel %vm779, %v763, %v795
        %v812 = vsel %vm780, %v764, %v796
        %v813 = vsel %vm781, %v765, %v797
        %v814 = vsel %vm782, %v766, %v798
        %v815 = vsel %vm783, %v767, %v799
        %v816 = vsel %vm784, %v768, %v800
        %v817 = vsel %vm785, %v769, %v801
        %v818 = vsel %vm786, %v770, %v802
        %v819 = vsel %vm787, %v771, %v803
        %820 = vrot.lane.b32.xlu0 %v804, 1
        %v821 = vpop.permute.xlu0 %820
        %822 = vrot.lane.b32.xlu0 %v805, 1
        %v823 = vpop.permute.xlu0 %822
        %824 = vrot.lane.b32.xlu0 %v806, 1
        %v825 = vpop.permute.xlu0 %824
        %826 = vrot.lane.b32.xlu0 %v807, 1
        %v827 = vpop.permute.xlu0 %826
        %828 = vrot.lane.b32.xlu0 %v808, 1
        %v829 = vpop.permute.xlu0 %828
        %830 = vrot.lane.b32.xlu0 %v809, 1
        %v831 = vpop.permute.xlu0 %830
        %832 = vrot.lane.b32.xlu0 %v810, 1
        %v833 = vpop.permute.xlu0 %832
        %834 = vrot.lane.b32.xlu0 %v811, 1
        %v835 = vpop.permute.xlu0 %834
        %836 = vrot.lane.b32.xlu0 %v812, 1
        %v837 = vpop.permute.xlu0 %836
        %838 = vrot.lane.b32.xlu0 %v813, 1
        %v839 = vpop.permute.xlu0 %838
        %840 = vrot.lane.b32.xlu0 %v814, 1
        %v841 = vpop.permute.xlu0 %840
        %842 = vrot.lane.b32.xlu0 %v815, 1
        %v843 = vpop.permute.xlu0 %842
        %844 = vrot.lane.b32.xlu0 %v816, 1
        %v845 = vpop.permute.xlu0 %844
        %846 = vrot.lane.b32.xlu0 %v817, 1
        %v847 = vpop.permute.xlu0 %846
        %848 = vrot.lane.b32.xlu0 %v818, 1
        %v849 = vpop.permute.xlu0 %848
        %850 = vrot.lane.b32.xlu0 %v819, 1
        %v851 = vpop.permute.xlu0 %850
        %v853 = vperm.slane %v342, 0
        %v855 = vmul.f32 %v821, %v853
        %v856 = vmul.f32 %v823, %v853
        %v857 = vmul.f32 %v825, %v853
        %v858 = vmul.f32 %v827, %v853
        %v859 = vmul.f32 %v829, %v853
        %v860 = vmul.f32 %v831, %v853
        %v861 = vmul.f32 %v833, %v853
        %v862 = vmul.f32 %v835, %v853
        %v863 = vmul.f32 %v837, %v853
        %v864 = vmul.f32 %v839, %v853
        %v865 = vmul.f32 %v841, %v853
        %v866 = vmul.f32 %v843, %v853
        %v867 = vmul.f32 %v845, %v853
        %v868 = vmul.f32 %v847, %v853
        %v869 = vmul.f32 %v849, %v853
        %v870 = vmul.f32 %v851, %v853
        %871 = vrot.lane.b32.xlu0 %v804, 127
        %v872 = vpop.permute.xlu0 %871
        %873 = vrot.lane.b32.xlu0 %v805, 127
        %v874 = vpop.permute.xlu0 %873
        %875 = vrot.lane.b32.xlu0 %v806, 127
        %v876 = vpop.permute.xlu0 %875
        %877 = vrot.lane.b32.xlu0 %v807, 127
        %v878 = vpop.permute.xlu0 %877
        %879 = vrot.lane.b32.xlu0 %v808, 127
        %v880 = vpop.permute.xlu0 %879
        %881 = vrot.lane.b32.xlu0 %v809, 127
        %v882 = vpop.permute.xlu0 %881
        %883 = vrot.lane.b32.xlu0 %v810, 127
        %v884 = vpop.permute.xlu0 %883
        %885 = vrot.lane.b32.xlu0 %v811, 127
        %v886 = vpop.permute.xlu0 %885
        %887 = vrot.lane.b32.xlu0 %v812, 127
        %v888 = vpop.permute.xlu0 %887
        %889 = vrot.lane.b32.xlu0 %v813, 127
        %v890 = vpop.permute.xlu0 %889
        %891 = vrot.lane.b32.xlu0 %v814, 127
        %v892 = vpop.permute.xlu0 %891
        %893 = vrot.lane.b32.xlu0 %v815, 127
        %v894 = vpop.permute.xlu0 %893
        %895 = vrot.lane.b32.xlu0 %v816, 127
        %v896 = vpop.permute.xlu0 %895
        %897 = vrot.lane.b32.xlu0 %v817, 127
        %v898 = vpop.permute.xlu0 %897
        %899 = vrot.lane.b32.xlu0 %v818, 127
        %v900 = vpop.permute.xlu0 %899
        %901 = vrot.lane.b32.xlu0 %v819, 127
        %v902 = vpop.permute.xlu0 %901
        %v904 = vperm.slane %v343, 0
        %v906 = vmul.f32 %v872, %v904
        %v907 = vmul.f32 %v874, %v904
        %v908 = vmul.f32 %v876, %v904
        %v909 = vmul.f32 %v878, %v904
        %v910 = vmul.f32 %v880, %v904
        %v911 = vmul.f32 %v882, %v904
        %v912 = vmul.f32 %v884, %v904
        %v913 = vmul.f32 %v886, %v904
        %v914 = vmul.f32 %v888, %v904
        %v915 = vmul.f32 %v890, %v904
        %v916 = vmul.f32 %v892, %v904
        %v917 = vmul.f32 %v894, %v904
        %v918 = vmul.f32 %v896, %v904
        %v919 = vmul.f32 %v898, %v904
        %v920 = vmul.f32 %v900, %v904
        %v921 = vmul.f32 %v902, %v904
        %v922 = vld [vmem:[#allocation3] sm:$0xff]
        %v923 = vld [vmem:[#allocation3 + $0x8] sm:$0xff]
        %v924 = vld [vmem:[#allocation3 + $0x10] sm:$0xff]
        %v925 = vld [vmem:[#allocation3 + $0x18] sm:$0xff]
        %v926 = vld [vmem:[#allocation3 + $0x20] sm:$0xff]
        %v927 = vld [vmem:[#allocation3 + $0x28] sm:$0xff]
        %v928 = vld [vmem:[#allocation3 + $0x30] sm:$0xff]
        %v929 = vld [vmem:[#allocation3 + $0x38] sm:$0xff]
        %v930 = vld [vmem:[#allocation3 + $0x40] sm:$0xff]
        %v931 = vld [vmem:[#allocation3 + $0x48] sm:$0xff]
        %v932 = vld [vmem:[#allocation3 + $0x50] sm:$0xff]
        %v933 = vld [vmem:[#allocation3 + $0x58] sm:$0xff]
        %v934 = vld [vmem:[#allocation3 + $0x60] sm:$0xff]
        %v935 = vld [vmem:[#allocation3 + $0x68] sm:$0xff]
        %v936 = vld [vmem:[#allocation3 + $0x70] sm:$0xff]
        %v937 = vld [vmem:[#allocation3 + $0x78] sm:$0xff]
        %v938 = vld [vmem:[#allocation3 + $0x80] sm:$0xff]
        %v939 = vld [vmem:[#allocation3 + $0x88] sm:$0xff]
        %v940 = vld [vmem:[#allocation3 + $0x90] sm:$0xff]
        %v941 = vld [vmem:[#allocation3 + $0x98] sm:$0xff]
        %v942 = vld [vmem:[#allocation3 + $0xa0] sm:$0xff]
        %v943 = vld [vmem:[#allocation3 + $0xa8] sm:$0xff]
        %v944 = vld [vmem:[#allocation3 + $0xb0] sm:$0xff]
        %v945 = vld [vmem:[#allocation3 + $0xb8] sm:$0xff]
        %v946 = vld [vmem:[#allocation3 + $0xc0] sm:$0xff]
        %v947 = vld [vmem:[#allocation3 + $0xc8] sm:$0xff]
        %v948 = vld [vmem:[#allocation3 + $0xd0] sm:$0xff]
        %v949 = vld [vmem:[#allocation3 + $0xd8] sm:$0xff]
        %v950 = vld [vmem:[#allocation3 + $0xe0] sm:$0xff]
        %v951 = vld [vmem:[#allocation3 + $0xe8] sm:$0xff]
        %v952 = vld [vmem:[#allocation3 + $0xf0] sm:$0xff]
        %v953 = vld [vmem:[#allocation3 + $0xf8] sm:$0xff]
        %v954 = vld [vmem:[#allocation3 + $0x100] sm:$0xff]
        %v955 = vld [vmem:[#allocation3 + $0x108] sm:$0xff]
        %v956 = vld [vmem:[#allocation3 + $0x110] sm:$0xff]
        %v957 = vld [vmem:[#allocation3 + $0x118] sm:$0xff]
        %v958 = vld [vmem:[#allocation3 + $0x120] sm:$0xff]
        %v959 = vld [vmem:[#allocation3 + $0x128] sm:$0xff]
        %v960 = vld [vmem:[#allocation3 + $0x130] sm:$0xff]
        %v961 = vld [vmem:[#allocation3 + $0x138] sm:$0xff]
        %v962 = vld [vmem:[#allocation3 + $0x140] sm:$0xff]
        %v963 = vld [vmem:[#allocation3 + $0x148] sm:$0xff]
        %v964 = vld [vmem:[#allocation3 + $0x150] sm:$0xff]
        %v965 = vld [vmem:[#allocation3 + $0x158] sm:$0xff]
        %v966 = vld [vmem:[#allocation3 + $0x160] sm:$0xff]
        %v967 = vld [vmem:[#allocation3 + $0x168] sm:$0xff]
        %v968 = vld [vmem:[#allocation3 + $0x170] sm:$0xff]
        %v969 = vld [vmem:[#allocation3 + $0x178] sm:$0xff]
        %v970 = vld [vmem:[#allocation3 + $0x180] sm:$0xff]
        %v971 = vld [vmem:[#allocation3 + $0x188] sm:$0xff]
        %v972 = vld [vmem:[#allocation3 + $0x190] sm:$0xff]
        %v973 = vld [vmem:[#allocation3 + $0x198] sm:$0xff]
        %v974 = vld [vmem:[#allocation3 + $0x1a0] sm:$0xff]
        %v975 = vld [vmem:[#allocation3 + $0x1a8] sm:$0xff]
        %v976 = vld [vmem:[#allocation3 + $0x1b0] sm:$0xff]
        %v977 = vld [vmem:[#allocation3 + $0x1b8] sm:$0xff]
        %v978 = vld [vmem:[#allocation3 + $0x1c0] sm:$0xff]
        %v979 = vld [vmem:[#allocation3 + $0x1c8] sm:$0xff]
        %v980 = vld [vmem:[#allocation3 + $0x1d0] sm:$0xff]
        %v981 = vld [vmem:[#allocation3 + $0x1d8] sm:$0xff]
        %v982 = vld [vmem:[#allocation3 + $0x1e0] sm:$0xff]
        %v983 = vld [vmem:[#allocation3 + $0x1e8] sm:$0xff]
        %v984 = vld [vmem:[#allocation3 + $0x1f0] sm:$0xff]
        %v985 = vld [vmem:[#allocation3 + $0x1f8] sm:$0xff]
        %v986 = vld [vmem:[#allocation3 + $0x200] sm:$0xff]
        %v987 = vld [vmem:[#allocation3 + $0x208] sm:$0xff]
        %v988 = vld [vmem:[#allocation3 + $0x210] sm:$0xff]
        %v989 = vld [vmem:[#allocation3 + $0x218] sm:$0xff]
        %v990 = vld [vmem:[#allocation3 + $0x220] sm:$0xff]
        %v991 = vld [vmem:[#allocation3 + $0x228] sm:$0xff]
        %v992 = vld [vmem:[#allocation3 + $0x230] sm:$0xff]
        %v993 = vld [vmem:[#allocation3 + $0x238] sm:$0xff]
        %v994 = vld [vmem:[#allocation3 + $0x240] sm:$0xff]
        %v995 = vld [vmem:[#allocation3 + $0x248] sm:$0xff]
        %v996 = vld [vmem:[#allocation3 + $0x250] sm:$0xff]
        %v997 = vld [vmem:[#allocation3 + $0x258] sm:$0xff]
        %v998 = vld [vmem:[#allocation3 + $0x260] sm:$0xff]
        %v999 = vld [vmem:[#allocation3 + $0x268] sm:$0xff]
        %v1000 = vld [vmem:[#allocation3 + $0x270] sm:$0xff]
        %v1001 = vld [vmem:[#allocation3 + $0x278] sm:$0xff]
        %v1002 = vld [vmem:[#allocation3 + $0x280] sm:$0xff]
        %v1003 = vld [vmem:[#allocation3 + $0x288] sm:$0xff]
        %v1004 = vld [vmem:[#allocation3 + $0x290] sm:$0xff]
        %v1005 = vld [vmem:[#allocation3 + $0x298] sm:$0xff]
        %v1006 = vld [vmem:[#allocation3 + $0x2a0] sm:$0xff]
        %v1007 = vld [vmem:[#allocation3 + $0x2a8] sm:$0xff]
        %v1008 = vld [vmem:[#allocation3 + $0x2b0] sm:$0xff]
        %v1009 = vld [vmem:[#allocation3 + $0x2b8] sm:$0xff]
        %v1010 = vld [vmem:[#allocation3 + $0x2c0] sm:$0xff]
        %v1011 = vld [vmem:[#allocation3 + $0x2c8] sm:$0xff]
        %v1012 = vld [vmem:[#allocation3 + $0x2d0] sm:$0xff]
        %v1013 = vld [vmem:[#allocation3 + $0x2d8] sm:$0xff]
        %v1014 = vld [vmem:[#allocation3 + $0x2e0] sm:$0xff]
        %v1015 = vld [vmem:[#allocation3 + $0x2e8] sm:$0xff]
        %v1016 = vld [vmem:[#allocation3 + $0x2f0] sm:$0xff]
        %v1017 = vld [vmem:[#allocation3 + $0x2f8] sm:$0xff]
        %v1018 = vld [vmem:[%s6] sm:$0xff]
        %v1019 = vld [vmem:[%s6 + $0x8] sm:$0xff]
        %v1020 = vld [vmem:[%s6 + $0x10] sm:$0xff]
        %v1021 = vld [vmem:[%s6 + $0x18] sm:$0xff]
        %v1022 = vld [vmem:[%s6 + $0x20] sm:$0xff]
        %v1023 = vld [vmem:[%s6 + $0x28] sm:$0xff]
        %v1024 = vld [vmem:[%s6 + $0x30] sm:$0xff]
        %v1025 = vld [vmem:[%s6 + $0x38] sm:$0xff]
        %v1026 = vld [vmem:[%s6 + $0x40] sm:$0xff]
        %v1027 = vld [vmem:[%s6 + $0x48] sm:$0xff]
        %v1028 = vld [vmem:[%s6 + $0x50] sm:$0xff]
        %v1029 = vld [vmem:[%s6 + $0x58] sm:$0xff]
        %v1030 = vld [vmem:[%s6 + $0x60] sm:$0xff]
        %v1031 = vld [vmem:[%s6 + $0x68] sm:$0xff]
        %v1032 = vld [vmem:[%s6 + $0x70] sm:$0xff]
        %v1033 = vld [vmem:[%s6 + $0x78] sm:$0xff]
        %v1034 = vld [vmem:[%s6 + $0x80] sm:$0xff]
        %v1035 = vld [vmem:[%s6 + $0x88] sm:$0xff]
        %v1036 = vld [vmem:[%s6 + $0x90] sm:$0xff]
        %v1037 = vld [vmem:[%s6 + $0x98] sm:$0xff]
        %v1038 = vld [vmem:[%s6 + $0xa0] sm:$0xff]
        %v1039 = vld [vmem:[%s6 + $0xa8] sm:$0xff]
        %v1040 = vld [vmem:[%s6 + $0xb0] sm:$0xff]
        %v1041 = vld [vmem:[%s6 + $0xb8] sm:$0xff]
        %v1042 = vld [vmem:[%s6 + $0xc0] sm:$0xff]
        %v1043 = vld [vmem:[%s6 + $0xc8] sm:$0xff]
        %v1044 = vld [vmem:[%s6 + $0xd0] sm:$0xff]
        %v1045 = vld [vmem:[%s6 + $0xd8] sm:$0xff]
        %v1046 = vld [vmem:[%s6 + $0xe0] sm:$0xff]
        %v1047 = vld [vmem:[%s6 + $0xe8] sm:$0xff]
        %v1048 = vld [vmem:[%s6 + $0xf0] sm:$0xff]
        %v1049 = vld [vmem:[%s6 + $0xf8] sm:$0xff]
        %1051 = vset.pattern.permute.xlu0 0
        %1052 = vperm.xlu0 %1051, %v1018
        %v1053 = vpop.permute.xlu0 %1052
        %1056 = vset.pattern.permute.xlu0 0
        %1057 = vperm.xlu0 %1056, %v1019
        %v1058 = vpop.permute.xlu0 %1057
        %1061 = vset.pattern.permute.xlu0 0
        %1062 = vperm.xlu0 %1061, %v1020
        %v1063 = vpop.permute.xlu0 %1062
        %1066 = vset.pattern.permute.xlu0 0
        %1067 = vperm.xlu0 %1066, %v1021
        %v1068 = vpop.permute.xlu0 %1067
        %1071 = vset.pattern.permute.xlu0 0
        %1072 = vperm.xlu0 %1071, %v1022
        %v1073 = vpop.permute.xlu0 %1072
        %1076 = vset.pattern.permute.xlu0 0
        %1077 = vperm.xlu0 %1076, %v1023
        %v1078 = vpop.permute.xlu0 %1077
        %1081 = vset.pattern.permute.xlu0 0
        %1082 = vperm.xlu0 %1081, %v1024
        %v1083 = vpop.permute.xlu0 %1082
        %1086 = vset.pattern.permute.xlu0 0
        %1087 = vperm.xlu0 %1086, %v1025
        %v1088 = vpop.permute.xlu0 %1087
        %1091 = vset.pattern.permute.xlu0 0
        %1092 = vperm.xlu0 %1091, %v1026
        %v1093 = vpop.permute.xlu0 %1092
        %1096 = vset.pattern.permute.xlu0 0
        %1097 = vperm.xlu0 %1096, %v1027
        %v1098 = vpop.permute.xlu0 %1097
        %1101 = vset.pattern.permute.xlu0 0
        %1102 = vperm.xlu0 %1101, %v1028
        %v1103 = vpop.permute.xlu0 %1102
        %1106 = vset.pattern.permute.xlu0 0
        %1107 = vperm.xlu0 %1106, %v1029
        %v1108 = vpop.permute.xlu0 %1107
        %1111 = vset.pattern.permute.xlu0 0
        %1112 = vperm.xlu0 %1111, %v1030
        %v1113 = vpop.permute.xlu0 %1112
        %1116 = vset.pattern.permute.xlu0 0
        %1117 = vperm.xlu0 %1116, %v1031
        %v1118 = vpop.permute.xlu0 %1117
        %1121 = vset.pattern.permute.xlu0 0
        %1122 = vperm.xlu0 %1121, %v1032
        %v1123 = vpop.permute.xlu0 %1122
        %1126 = vset.pattern.permute.xlu0 0
        %1127 = vperm.xlu0 %1126, %v1033
        %v1128 = vpop.permute.xlu0 %1127
        %1131 = vset.pattern.permute.xlu0 0
        %1132 = vperm.xlu0 %1131, %v1034
        %v1133 = vpop.permute.xlu0 %1132
        %1136 = vset.pattern.permute.xlu0 0
        %1137 = vperm.xlu0 %1136, %v1035
        %v1138 = vpop.permute.xlu0 %1137
        %1141 = vset.pattern.permute.xlu0 0
        %1142 = vperm.xlu0 %1141, %v1036
        %v1143 = vpop.permute.xlu0 %1142
        %1146 = vset.pattern.permute.xlu0 0
        %1147 = vperm.xlu0 %1146, %v1037
        %v1148 = vpop.permute.xlu0 %1147
        %1151 = vset.pattern.permute.xlu0 0
        %1152 = vperm.xlu0 %1151, %v1038
        %v1153 = vpop.permute.xlu0 %1152
        %1156 = vset.pattern.permute.xlu0 0
        %1157 = vperm.xlu0 %1156, %v1039
        %v1158 = vpop.permute.xlu0 %1157
        %1161 = vset.pattern.permute.xlu0 0
        %1162 = vperm.xlu0 %1161, %v1040
        %v1163 = vpop.permute.xlu0 %1162
        %1166 = vset.pattern.permute.xlu0 0
        %1167 = vperm.xlu0 %1166, %v1041
        %v1168 = vpop.permute.xlu0 %1167
        %1171 = vset.pattern.permute.xlu0 0
        %1172 = vperm.xlu0 %1171, %v1042
        %v1173 = vpop.permute.xlu0 %1172
        %1176 = vset.pattern.permute.xlu0 0
        %1177 = vperm.xlu0 %1176, %v1043
        %v1178 = vpop.permute.xlu0 %1177
        %1181 = vset.pattern.permute.xlu0 0
        %1182 = vperm.xlu0 %1181, %v1044
        %v1183 = vpop.permute.xlu0 %1182
        %1186 = vset.pattern.permute.xlu0 0
        %1187 = vperm.xlu0 %1186, %v1045
        %v1188 = vpop.permute.xlu0 %1187
        %1191 = vset.pattern.permute.xlu0 0
        %1192 = vperm.xlu0 %1191, %v1046
        %v1193 = vpop.permute.xlu0 %1192
        %1196 = vset.pattern.permute.xlu0 0
        %1197 = vperm.xlu0 %1196, %v1047
        %v1198 = vpop.permute.xlu0 %1197
        %1201 = vset.pattern.permute.xlu0 0
        %1202 = vperm.xlu0 %1201, %v1048
        %v1203 = vpop.permute.xlu0 %1202
        %1206 = vset.pattern.permute.xlu0 0
        %1207 = vperm.xlu0 %1206, %v1049
        %v1208 = vpop.permute.xlu0 %1207
        %1210 = vmatpush.msra.mxu0 %v870
        %1211 = vmatpush.msra.mxu0 %v869
        %1212 = vmatpush.msra.mxu0 %v868
        %1213 = vmatpush.msra.mxu0 %v867
        %1214 = vmatpush.msra.mxu0 %v866
        %1215 = vmatpush.msra.mxu0 %v865
        %1216 = vmatpush.msra.mxu0 %v864
        %1217 = vmatpush.msra.mxu0 %v863
        %1218 = vmatpush.msra.mxu0 %v862
        %1219 = vmatpush.msra.mxu0 %v861
        %1220 = vmatpush.msra.mxu0 %v860
        %1221 = vmatpush.msra.mxu0 %v859
        %1222 = vmatpush.msra.mxu0 %v858
        %1223 = vmatpush.msra.mxu0 %v857
        %1224 = vmatpush.msra.mxu0 %v856
        %1225 = vmatpush.msra.mxu0 %v855
        %1226 = vmatmul.f32.gmra.mxu0 %v922
        %v1227 = vpop.f32.mrf.mxu0
        %v1228 = vadd.f32 %v1053, %v1227
        %1229 = vmatmul.f32.gmra.mxu0 %v925
        %v1230 = vpop.f32.mrf.mxu0
        %v1231 = vadd.f32 %v1058, %v1230
        %1232 = vmatmul.f32.gmra.mxu0 %v928
        %v1233 = vpop.f32.mrf.mxu0
        %v1234 = vadd.f32 %v1063, %v1233
        %1235 = vmatmul.f32.gmra.mxu0 %v931
        %v1236 = vpop.f32.mrf.mxu0
        %v1237 = vadd.f32 %v1068, %v1236
        %1238 = vmatmul.f32.gmra.mxu0 %v934
        %v1239 = vpop.f32.mrf.mxu0
        %v1240 = vadd.f32 %v1073, %v1239
        %1241 = vmatmul.f32.gmra.mxu0 %v937
        %v1242 = vpop.f32.mrf.mxu0
        %v1243 = vadd.f32 %v1078, %v1242
        %1244 = vmatmul.f32.gmra.mxu0 %v940
        %v1245 = vpop.f32.mrf.mxu0
        %v1246 = vadd.f32 %v1083, %v1245
        %1247 = vmatmul.f32.gmra.mxu0 %v943
        %v1248 = vpop.f32.mrf.mxu0
        %v1249 = vadd.f32 %v1088, %v1248
        %1250 = vmatmul.f32.gmra.mxu0 %v946
        %v1251 = vpop.f32.mrf.mxu0
        %v1252 = vadd.f32 %v1093, %v1251
        %1253 = vmatmul.f32.gmra.mxu0 %v949
        %v1254 = vpop.f32.mrf.mxu0
        %v1255 = vadd.f32 %v1098, %v1254
        %1256 = vmatmul.f32.gmra.mxu0 %v952
        %v1257 = vpop.f32.mrf.mxu0
        %v1258 = vadd.f32 %v1103, %v1257
        %1259 = vmatmul.f32.gmra.mxu0 %v955
        %v1260 = vpop.f32.mrf.mxu0
        %v1261 = vadd.f32 %v1108, %v1260
        %1262 = vmatmul.f32.gmra.mxu0 %v958
        %v1263 = vpop.f32.mrf.mxu0
        %v1264 = vadd.f32 %v1113, %v1263
        %1265 = vmatmul.f32.gmra.mxu0 %v961
        %v1266 = vpop.f32.mrf.mxu0
        %v1267 = vadd.f32 %v1118, %v1266
        %1268 = vmatmul.f32.gmra.mxu0 %v964
        %v1269 = vpop.f32.mrf.mxu0
        %v1270 = vadd.f32 %v1123, %v1269
        %1271 = vmatmul.f32.gmra.mxu0 %v967
        %v1272 = vpop.f32.mrf.mxu0
        %v1273 = vadd.f32 %v1128, %v1272
        %1274 = vmatmul.f32.gmra.mxu0 %v970
        %v1275 = vpop.f32.mrf.mxu0
        %v1276 = vadd.f32 %v1133, %v1275
        %1277 = vmatmul.f32.gmra.mxu0 %v973
        %v1278 = vpop.f32.mrf.mxu0
        %v1279 = vadd.f32 %v1138, %v1278
        %1280 = vmatmul.f32.gmra.mxu0 %v976
        %v1281 = vpop.f32.mrf.mxu0
        %v1282 = vadd.f32 %v1143, %v1281
        %1283 = vmatmul.f32.gmra.mxu0 %v979
        %v1284 = vpop.f32.mrf.mxu0
        %v1285 = vadd.f32 %v1148, %v1284
        %1286 = vmatmul.f32.gmra.mxu0 %v982
        %v1287 = vpop.f32.mrf.mxu0
        %v1288 = vadd.f32 %v1153, %v1287
        %1289 = vmatmul.f32.gmra.mxu0 %v985
        %v1290 = vpop.f32.mrf.mxu0
        %v1291 = vadd.f32 %v1158, %v1290
        %1292 = vmatmul.f32.gmra.mxu0 %v988
        %v1293 = vpop.f32.mrf.mxu0
        %v1294 = vadd.f32 %v1163, %v1293
        %1295 = vmatmul.f32.gmra.mxu0 %v991
        %v1296 = vpop.f32.mrf.mxu0
        %v1297 = vadd.f32 %v1168, %v1296
        %1298 = vmatmul.f32.gmra.mxu0 %v994
        %v1299 = vpop.f32.mrf.mxu0
        %v1300 = vadd.f32 %v1173, %v1299
        %1301 = vmatmul.f32.gmra.mxu0 %v997
        %v1302 = vpop.f32.mrf.mxu0
        %v1303 = vadd.f32 %v1178, %v1302
        %1304 = vmatmul.f32.gmra.mxu0 %v1000
        %v1305 = vpop.f32.mrf.mxu0
        %v1306 = vadd.f32 %v1183, %v1305
        %1307 = vmatmul.f32.gmra.mxu0 %v1003
        %v1308 = vpop.f32.mrf.mxu0
        %v1309 = vadd.f32 %v1188, %v1308
        %1310 = vmatmul.f32.gmra.mxu0 %v1006
        %v1311 = vpop.f32.mrf.mxu0
        %v1312 = vadd.f32 %v1193, %v1311
        %1313 = vmatmul.f32.gmra.mxu0 %v1009
        %v1314 = vpop.f32.mrf.mxu0
        %v1315 = vadd.f32 %v1198, %v1314
        %1316 = vmatmul.f32.gmra.mxu0 %v1012
        %v1317 = vpop.f32.mrf.mxu0
        %v1318 = vadd.f32 %v1203, %v1317
        %1319 = vmatmul.f32.gmra.mxu0 %v1015
        %v1320 = vpop.f32.mrf.mxu0
        %v1321 = vadd.f32 %v1208, %v1320
        %1322 = vdwg.mxu0
        %1323 = vmatpush.msra.mxu0 %v819
        %1324 = vmatpush.msra.mxu0 %v818
        %1325 = vmatpush.msra.mxu0 %v817
        %1326 = vmatpush.msra.mxu0 %v816
        %1327 = vmatpush.msra.mxu0 %v815
        %1328 = vmatpush.msra.mxu0 %v814
        %1329 = vmatpush.msra.mxu0 %v813
        %1330 = vmatpush.msra.mxu0 %v812
        %1331 = vmatpush.msra.mxu0 %v811
        %1332 = vmatpush.msra.mxu0 %v810
        %1333 = vmatpush.msra.mxu0 %v809
        %1334 = vmatpush.msra.mxu0 %v808
        %1335 = vmatpush.msra.mxu0 %v807
        %1336 = vmatpush.msra.mxu0 %v806
        %1337 = vmatpush.msra.mxu0 %v805
        %1338 = vmatpush.msra.mxu0 %v804
        %1339 = vmatmul.f32.gmra.mxu0 %v923
        %v1340 = vpop.f32.mrf.mxu0
        %v1341 = vadd.f32 %v1228, %v1340
        %1342 = vmatmul.f32.gmra.mxu0 %v926
        %v1343 = vpop.f32.mrf.mxu0
        %v1344 = vadd.f32 %v1231, %v1343
        %1345 = vmatmul.f32.gmra.mxu0 %v929
        %v1346 = vpop.f32.mrf.mxu0
        %v1347 = vadd.f32 %v1234, %v1346
        %1348 = vmatmul.f32.gmra.mxu0 %v932
        %v1349 = vpop.f32.mrf.mxu0
        %v1350 = vadd.f32 %v1237, %v1349
        %1351 = vmatmul.f32.gmra.mxu0 %v935
        %v1352 = vpop.f32.mrf.mxu0
        %v1353 = vadd.f32 %v1240, %v1352
        %1354 = vmatmul.f32.gmra.mxu0 %v938
        %v1355 = vpop.f32.mrf.mxu0
        %v1356 = vadd.f32 %v1243, %v1355
        %1357 = vmatmul.f32.gmra.mxu0 %v941
        %v1358 = vpop.f32.mrf.mxu0
        %v1359 = vadd.f32 %v1246, %v1358
        %1360 = vmatmul.f32.gmra.mxu0 %v944
        %v1361 = vpop.f32.mrf.mxu0
        %v1362 = vadd.f32 %v1249, %v1361
        %1363 = vmatmul.f32.gmra.mxu0 %v947
        %v1364 = vpop.f32.mrf.mxu0
        %v1365 = vadd.f32 %v1252, %v1364
        %1366 = vmatmul.f32.gmra.mxu0 %v950
        %v1367 = vpop.f32.mrf.mxu0
        %v1368 = vadd.f32 %v1255, %v1367
        %1369 = vmatmul.f32.gmra.mxu0 %v953
        %v1370 = vpop.f32.mrf.mxu0
        %v1371 = vadd.f32 %v1258, %v1370
        %1372 = vmatmul.f32.gmra.mxu0 %v956
        %v1373 = vpop.f32.mrf.mxu0
        %v1374 = vadd.f32 %v1261, %v1373
        %1375 = vmatmul.f32.gmra.mxu0 %v959
        %v1376 = vpop.f32.mrf.mxu0
        %v1377 = vadd.f32 %v1264, %v1376
        %1378 = vmatmul.f32.gmra.mxu0 %v962
        %v1379 = vpop.f32.mrf.mxu0
        %v1380 = vadd.f32 %v1267, %v1379
        %1381 = vmatmul.f32.gmra.mxu0 %v965
        %v1382 = vpop.f32.mrf.mxu0
        %v1383 = vadd.f32 %v1270, %v1382
        %1384 = vmatmul.f32.gmra.mxu0 %v968
        %v1385 = vpop.f32.mrf.mxu0
        %v1386 = vadd.f32 %v1273, %v1385
        %1387 = vmatmul.f32.gmra.mxu0 %v971
        %v1388 = vpop.f32.mrf.mxu0
        %v1389 = vadd.f32 %v1276, %v1388
        %1390 = vmatmul.f32.gmra.mxu0 %v974
        %v1391 = vpop.f32.mrf.mxu0
        %v1392 = vadd.f32 %v1279, %v1391
        %1393 = vmatmul.f32.gmra.mxu0 %v977
        %v1394 = vpop.f32.mrf.mxu0
        %v1395 = vadd.f32 %v1282, %v1394
        %1396 = vmatmul.f32.gmra.mxu0 %v980
        %v1397 = vpop.f32.mrf.mxu0
        %v1398 = vadd.f32 %v1285, %v1397
        %1399 = vmatmul.f32.gmra.mxu0 %v983
        %v1400 = vpop.f32.mrf.mxu0
        %v1401 = vadd.f32 %v1288, %v1400
        %1402 = vmatmul.f32.gmra.mxu0 %v986
        %v1403 = vpop.f32.mrf.mxu0
        %v1404 = vadd.f32 %v1291, %v1403
        %1405 = vmatmul.f32.gmra.mxu0 %v989
        %v1406 = vpop.f32.mrf.mxu0
        %v1407 = vadd.f32 %v1294, %v1406
        %1408 = vmatmul.f32.gmra.mxu0 %v992
        %v1409 = vpop.f32.mrf.mxu0
        %v1410 = vadd.f32 %v1297, %v1409
        %1411 = vmatmul.f32.gmra.mxu0 %v995
        %v1412 = vpop.f32.mrf.mxu0
        %v1413 = vadd.f32 %v1300, %v1412
        %1414 = vmatmul.f32.gmra.mxu0 %v998
        %v1415 = vpop.f32.mrf.mxu0
        %v1416 = vadd.f32 %v1303, %v1415
        %1417 = vmatmul.f32.gmra.mxu0 %v1001
        %v1418 = vpop.f32.mrf.mxu0
        %v1419 = vadd.f32 %v1306, %v1418
        %1420 = vmatmul.f32.gmra.mxu0 %v1004
        %v1421 = vpop.f32.mrf.mxu0
        %v1422 = vadd.f32 %v1309, %v1421
        %1423 = vmatmul.f32.gmra.mxu0 %v1007
        %v1424 = vpop.f32.mrf.mxu0
        %v1425 = vadd.f32 %v1312, %v1424
        %1426 = vmatmul.f32.gmra.mxu0 %v1010
        %v1427 = vpop.f32.mrf.mxu0
        %v1428 = vadd.f32 %v1315, %v1427
        %1429 = vmatmul.f32.gmra.mxu0 %v1013
        %v1430 = vpop.f32.mrf.mxu0
        %v1431 = vadd.f32 %v1318, %v1430
        %1432 = vmatmul.f32.gmra.mxu0 %v1016
        %v1433 = vpop.f32.mrf.mxu0
        %v1434 = vadd.f32 %v1321, %v1433
        %1435 = vdwg.mxu0
        %1436 = vmatpush.msra.mxu0 %v921
        %1437 = vmatpush.msra.mxu0 %v920
        %1438 = vmatpush.msra.mxu0 %v919
        %1439 = vmatpush.msra.mxu0 %v918
        %1440 = vmatpush.msra.mxu0 %v917
        %1441 = vmatpush.msra.mxu0 %v916
        %1442 = vmatpush.msra.mxu0 %v915
        %1443 = vmatpush.msra.mxu0 %v914
        %1444 = vmatpush.msra.mxu0 %v913
        %1445 = vmatpush.msra.mxu0 %v912
        %1446 = vmatpush.msra.mxu0 %v911
        %1447 = vmatpush.msra.mxu0 %v910
        %1448 = vmatpush.msra.mxu0 %v909
        %1449 = vmatpush.msra.mxu0 %v908
        %1450 = vmatpush.msra.mxu0 %v907
        %1451 = vmatpush.msra.mxu0 %v906
        %1452 = vmatmul.f32.gmra.mxu0 %v924
        %v1453 = vpop.f32.mrf.mxu0
        %v1454 = vadd.f32 %v1341, %v1453
        %1455 = vmatmul.f32.gmra.mxu0 %v927
        %v1456 = vpop.f32.mrf.mxu0
        %v1457 = vadd.f32 %v1344, %v1456
        %1458 = vmatmul.f32.gmra.mxu0 %v930
        %v1459 = vpop.f32.mrf.mxu0
        %v1460 = vadd.f32 %v1347, %v1459
        %1461 = vmatmul.f32.gmra.mxu0 %v933
        %v1462 = vpop.f32.mrf.mxu0
        %v1463 = vadd.f32 %v1350, %v1462
        %1464 = vmatmul.f32.gmra.mxu0 %v936
        %v1465 = vpop.f32.mrf.mxu0
        %v1466 = vadd.f32 %v1353, %v1465
        %1467 = vmatmul.f32.gmra.mxu0 %v939
        %v1468 = vpop.f32.mrf.mxu0
        %v1469 = vadd.f32 %v1356, %v1468
        %1470 = vmatmul.f32.gmra.mxu0 %v942
        %v1471 = vpop.f32.mrf.mxu0
        %v1472 = vadd.f32 %v1359, %v1471
        %1473 = vmatmul.f32.gmra.mxu0 %v945
        %v1474 = vpop.f32.mrf.mxu0
        %v1475 = vadd.f32 %v1362, %v1474
        %1476 = vmatmul.f32.gmra.mxu0 %v948
        %v1477 = vpop.f32.mrf.mxu0
        %v1478 = vadd.f32 %v1365, %v1477
        %1479 = vmatmul.f32.gmra.mxu0 %v951
        %v1480 = vpop.f32.mrf.mxu0
        %v1481 = vadd.f32 %v1368, %v1480
        %1482 = vmatmul.f32.gmra.mxu0 %v954
        %v1483 = vpop.f32.mrf.mxu0
        %v1484 = vadd.f32 %v1371, %v1483
        %1485 = vmatmul.f32.gmra.mxu0 %v957
        %v1486 = vpop.f32.mrf.mxu0
        %v1487 = vadd.f32 %v1374, %v1486
        %1488 = vmatmul.f32.gmra.mxu0 %v960
        %v1489 = vpop.f32.mrf.mxu0
        %v1490 = vadd.f32 %v1377, %v1489
        %1491 = vmatmul.f32.gmra.mxu0 %v963
        %v1492 = vpop.f32.mrf.mxu0
        %v1493 = vadd.f32 %v1380, %v1492
        %1494 = vmatmul.f32.gmra.mxu0 %v966
        %v1495 = vpop.f32.mrf.mxu0
        %v1496 = vadd.f32 %v1383, %v1495
        %1497 = vmatmul.f32.gmra.mxu0 %v969
        %v1498 = vpop.f32.mrf.mxu0
        %v1499 = vadd.f32 %v1386, %v1498
        %1500 = vmatmul.f32.gmra.mxu0 %v972
        %v1501 = vpop.f32.mrf.mxu0
        %v1502 = vadd.f32 %v1389, %v1501
        %1503 = vmatmul.f32.gmra.mxu0 %v975
        %v1504 = vpop.f32.mrf.mxu0
        %v1505 = vadd.f32 %v1392, %v1504
        %1506 = vmatmul.f32.gmra.mxu0 %v978
        %v1507 = vpop.f32.mrf.mxu0
        %v1508 = vadd.f32 %v1395, %v1507
        %1509 = vmatmul.f32.gmra.mxu0 %v981
        %v1510 = vpop.f32.mrf.mxu0
        %v1511 = vadd.f32 %v1398, %v1510
        %1512 = vmatmul.f32.gmra.mxu0 %v984
        %v1513 = vpop.f32.mrf.mxu0
        %v1514 = vadd.f32 %v1401, %v1513
        %1515 = vmatmul.f32.gmra.mxu0 %v987
        %v1516 = vpop.f32.mrf.mxu0
        %v1517 = vadd.f32 %v1404, %v1516
        %1518 = vmatmul.f32.gmra.mxu0 %v990
        %v1519 = vpop.f32.mrf.mxu0
        %v1520 = vadd.f32 %v1407, %v1519
        %1521 = vmatmul.f32.gmra.mxu0 %v993
        %v1522 = vpop.f32.mrf.mxu0
        %v1523 = vadd.f32 %v1410, %v1522
        %1524 = vmatmul.f32.gmra.mxu0 %v996
        %v1525 = vpop.f32.mrf.mxu0
        %v1526 = vadd.f32 %v1413, %v1525
        %1527 = vmatmul.f32.gmra.mxu0 %v999
        %v1528 = vpop.f32.mrf.mxu0
        %v1529 = vadd.f32 %v1416, %v1528
        %1530 = vmatmul.f32.gmra.mxu0 %v1002
        %v1531 = vpop.f32.mrf.mxu0
        %v1532 = vadd.f32 %v1419, %v1531
        %1533 = vmatmul.f32.gmra.mxu0 %v1005
        %v1534 = vpop.f32.mrf.mxu0
        %v1535 = vadd.f32 %v1422, %v1534
        %1536 = vmatmul.f32.gmra.mxu0 %v1008
        %v1537 = vpop.f32.mrf.mxu0
        %v1538 = vadd.f32 %v1425, %v1537
        %1539 = vmatmul.f32.gmra.mxu0 %v1011
        %v1540 = vpop.f32.mrf.mxu0
        %v1541 = vadd.f32 %v1428, %v1540
        %1542 = vmatmul.f32.gmra.mxu0 %v1014
        %v1543 = vpop.f32.mrf.mxu0
        %v1544 = vadd.f32 %v1431, %v1543
        %1545 = vmatmul.f32.gmra.mxu0 %v1017
        %v1546 = vpop.f32.mrf.mxu0
        %v1547 = vadd.f32 %v1434, %v1546
        %1548 = vdwg.mxu0
        %vm1549 = vcmp.ge.f32.partialorder %v1454, 0.0
        %vm1550 = vcmp.ge.f32.partialorder %v1457, 0.0
        %vm1551 = vcmp.ge.f32.partialorder %v1460, 0.0
        %vm1552 = vcmp.ge.f32.partialorder %v1463, 0.0
        %vm1553 = vcmp.ge.f32.partialorder %v1466, 0.0
        %vm1554 = vcmp.ge.f32.partialorder %v1469, 0.0
        %vm1555 = vcmp.ge.f32.partialorder %v1472, 0.0
        %vm1556 = vcmp.ge.f32.partialorder %v1475, 0.0
        %vm1557 = vcmp.ge.f32.partialorder %v1478, 0.0
        %vm1558 = vcmp.ge.f32.partialorder %v1481, 0.0
        %vm1559 = vcmp.ge.f32.partialorder %v1484, 0.0
        %vm1560 = vcmp.ge.f32.partialorder %v1487, 0.0
        %vm1561 = vcmp.ge.f32.partialorder %v1490, 0.0
        %vm1562 = vcmp.ge.f32.partialorder %v1493, 0.0
        %vm1563 = vcmp.ge.f32.partialorder %v1496, 0.0
        %vm1564 = vcmp.ge.f32.partialorder %v1499, 0.0
        %vm1565 = vcmp.ge.f32.partialorder %v1502, 0.0
        %vm1566 = vcmp.ge.f32.partialorder %v1505, 0.0
        %vm1567 = vcmp.ge.f32.partialorder %v1508, 0.0
        %vm1568 = vcmp.ge.f32.partialorder %v1511, 0.0
        %vm1569 = vcmp.ge.f32.partialorder %v1514, 0.0
        %vm1570 = vcmp.ge.f32.partialorder %v1517, 0.0
        %vm1571 = vcmp.ge.f32.partialorder %v1520, 0.0
        %vm1572 = vcmp.ge.f32.partialorder %v1523, 0.0
        %vm1573 = vcmp.ge.f32.partialorder %v1526, 0.0
        %vm1574 = vcmp.ge.f32.partialorder %v1529, 0.0
        %vm1575 = vcmp.ge.f32.partialorder %v1532, 0.0
        %vm1576 = vcmp.ge.f32.partialorder %v1535, 0.0
        %vm1577 = vcmp.ge.f32.partialorder %v1538, 0.0
        %vm1578 = vcmp.ge.f32.partialorder %v1541, 0.0
        %vm1579 = vcmp.ge.f32.partialorder %v1544, 0.0
        %vm1580 = vcmp.ge.f32.partialorder %v1547, 0.0
        %v1581 = vmul.f32 %v1454, 0.2
        %v1582 = vmul.f32 %v1457, 0.2
        %v1583 = vmul.f32 %v1460, 0.2
        %v1584 = vmul.f32 %v1463, 0.2
        %v1585 = vmul.f32 %v1466, 0.2
        %v1586 = vmul.f32 %v1469, 0.2
        %v1587 = vmul.f32 %v1472, 0.2
        %v1588 = vmul.f32 %v1475, 0.2
        %v1589 = vmul.f32 %v1478, 0.2
        %v1590 = vmul.f32 %v1481, 0.2
        %v1591 = vmul.f32 %v1484, 0.2
        %v1592 = vmul.f32 %v1487, 0.2
        %v1593 = vmul.f32 %v1490, 0.2
        %v1594 = vmul.f32 %v1493, 0.2
        %v1595 = vmul.f32 %v1496, 0.2
        %v1596 = vmul.f32 %v1499, 0.2
        %v1597 = vmul.f32 %v1502, 0.2
        %v1598 = vmul.f32 %v1505, 0.2
        %v1599 = vmul.f32 %v1508, 0.2
        %v1600 = vmul.f32 %v1511, 0.2
        %v1601 = vmul.f32 %v1514, 0.2
        %v1602 = vmul.f32 %v1517, 0.2
        %v1603 = vmul.f32 %v1520, 0.2
        %v1604 = vmul.f32 %v1523, 0.2
        %v1605 = vmul.f32 %v1526, 0.2
        %v1606 = vmul.f32 %v1529, 0.2
        %v1607 = vmul.f32 %v1532, 0.2
        %v1608 = vmul.f32 %v1535, 0.2
        %v1609 = vmul.f32 %v1538, 0.2
        %v1610 = vmul.f32 %v1541, 0.2
        %v1611 = vmul.f32 %v1544, 0.2
        %v1612 = vmul.f32 %v1547, 0.2
        %v1613 = vsel %vm1549, %v1454, %v1581
        %v1614 = vsel %vm1550, %v1457, %v1582
        %v1615 = vsel %vm1551, %v1460, %v1583
        %v1616 = vsel %vm1552, %v1463, %v1584
        %v1617 = vsel %vm1553, %v1466, %v1585
        %v1618 = vsel %vm1554, %v1469, %v1586
        %v1619 = vsel %vm1555, %v1472, %v1587
        %v1620 = vsel %vm1556, %v1475, %v1588
        %v1621 = vsel %vm1557, %v1478, %v1589
        %v1622 = vsel %vm1558, %v1481, %v1590
        %v1623 = vsel %vm1559, %v1484, %v1591
        %v1624 = vsel %vm1560, %v1487, %v1592
        %v1625 = vsel %vm1561, %v1490, %v1593
        %v1626 = vsel %vm1562, %v1493, %v1594
        %v1627 = vsel %vm1563, %v1496, %v1595
        %v1628 = vsel %vm1564, %v1499, %v1596
        %v1629 = vsel %vm1565, %v1502, %v1597
        %v1630 = vsel %vm1566, %v1505, %v1598
        %v1631 = vsel %vm1567, %v1508, %v1599
        %v1632 = vsel %vm1568, %v1511, %v1600
        %v1633 = vsel %vm1569, %v1514, %v1601
        %v1634 = vsel %vm1570, %v1517, %v1602
        %v1635 = vsel %vm1571, %v1520, %v1603
        %v1636 = vsel %vm1572, %v1523, %v1604
        %v1637 = vsel %vm1573, %v1526, %v1605
        %v1638 = vsel %vm1574, %v1529, %v1606
        %v1639 = vsel %vm1575, %v1532, %v1607
        %v1640 = vsel %vm1576, %v1535, %v1608
        %v1641 = vsel %vm1577, %v1538, %v1609
        %v1642 = vsel %vm1578, %v1541, %v1610
        %v1643 = vsel %vm1579, %v1544, %v1611
        %v1644 = vsel %vm1580, %v1547, %v1612
        %v1645 = vld [vmem:[%s7] sm:$0x77]
        %1647 = vst [vmem:[#allocation1] ss:$2 sm:$0xff] %v1645
        %v1648 = vld.sshfl [vmem:[#allocation1] sm:$0xff pattern:$0x75316420]
        %v1649 = vld.sshfl [vmem:[#allocation1 + $0x8] sm:$0xff pattern:$0x75316420]
        %1652 = vmatpush.msra.mxu0 %v1628
        %1653 = vmatpush.msra.mxu0 %v1627
        %1654 = vmatpush.msra.mxu0 %v1626
        %1655 = vmatpush.msra.mxu0 %v1625
        %1656 = vmatpush.msra.mxu0 %v1624
        %1657 = vmatpush.msra.mxu0 %v1623
        %1658 = vmatpush.msra.mxu0 %v1622
        %1659 = vmatpush.msra.mxu0 %v1621
        %1660 = vmatpush.msra.mxu0 %v1620
        %1661 = vmatpush.msra.mxu0 %v1619
        %1662 = vmatpush.msra.mxu0 %v1618
        %1663 = vmatpush.msra.mxu0 %v1617
        %1664 = vmatpush.msra.mxu0 %v1616
        %1665 = vmatpush.msra.mxu0 %v1615
        %1666 = vmatpush.msra.mxu0 %v1614
        %1667 = vmatpush.msra.mxu0 %v1613
        %1668 = vmatmul.f32.gmra.mxu0 %v1648
        %v1669 = vpop.f32.mrf.mxu0
        %v1670 = vadd.f32 0.0, %v1669
        %1671 = vdwg.mxu0
        %1672 = vmatpush.msra.mxu0 %v1644
        %1673 = vmatpush.msra.mxu0 %v1643
        %1674 = vmatpush.msra.mxu0 %v1642
        %1675 = vmatpush.msra.mxu0 %v1641
        %1676 = vmatpush.msra.mxu0 %v1640
        %1677 = vmatpush.msra.mxu0 %v1639
        %1678 = vmatpush.msra.mxu0 %v1638
        %1679 = vmatpush.msra.mxu0 %v1637
        %1680 = vmatpush.msra.mxu0 %v1636
        %1681 = vmatpush.msra.mxu0 %v1635
        %1682 = vmatpush.msra.mxu0 %v1634
        %1683 = vmatpush.msra.mxu0 %v1633
        %1684 = vmatpush.msra.mxu0 %v1632
        %1685 = vmatpush.msra.mxu0 %v1631
        %1686 = vmatpush.msra.mxu0 %v1630
        %1687 = vmatpush.msra.mxu0 %v1629
        %1688 = vmatmul.f32.gmra.mxu0 %v1649
        %v1689 = vpop.f32.mrf.mxu0
        %v1690 = vadd.f32 %v1670, %v1689
        %1691 = vdwg.mxu0
        %1692 = vrot.lane.b32.xlu0 %v1690, 1
        %v1693 = vpop.permute.xlu0 %1692
        %v1694 = vmul.f32 %v1693, %v342
        %v1696 = vrot.slane %v1690, 1
        %v1698 = vadd.f32 %v1694, %v1696
        %v1699 = vrot.slane %v1690, 2
        %1701 = vrot.lane.b32.xlu0 %v1699, 127
        %v1702 = vpop.permute.xlu0 %1701
        %v1703 = vmul.f32 %v1702, %v343
        %v1704 = vadd.f32 %v1698, %v1703
        %s1705 = sld [smem:[#allocation2]]
        %v1706 = vstv %s1705
        %v1707 = vadd.f32 %v1704, %v1706
        %vm1708 = vcmp.ge.f32.partialorder %v1707, 0.0
        %v1709 = vmul.f32 %v1707, 0.2
        %v1710 = vsel %vm1708, %v1707, %v1709
        %1711 = vst [vmem:[%s338] sm:$0x1] %v1710
        %s1712 = sand.u32 %s227, 1
        %s1713 = scalar_lea.sflag [#allocation5], %s1712
        %s1714 = sand.u32 %s227, 1
        %s1715 = scalar_lea.vmem [#allocation6], %s1714
        // Predicated region
        $region61: #{tpu_custom_call.1} parent=55 // pred_check
          %p1716 = pneg %p237
        $region62: #{tpu_custom_call.1} parent=55 // pred_check_branch
          %1718 = sbr.rel (%p1716) target = $region64
        $region63: #{tpu_custom_call.1} parent=55 // pred_region
          %1720 = vsyncadd %s1713, 0
          %s1721 = scalar_lea.hbm %s9, %s25
          %s1723 = sshll.u32 %s1715, 4
          %s1724 = int_to_ptr.vmem [resolvable:$true] %s1723
          %s1725 = sshll.u32 %s1721, 4
          %s1726 = int_to_ptr.hbm [resolvable:$true] %s1725
          %1728 = dma.vmem_to_hbm [thread:$0]  %s1724, 16, %s1726, %s1713
        $region64: #{tpu_custom_call.1} parent=55 // pred_fallthru
          _
      $region56: #{tpu_custom_call.1} parent=5 // pred_fallthru
        _
      %p1729 = scmp.le.s32.totalorder 2, %s20
      // Predicated region
      $region65: #{tpu_custom_call.1} parent=5 // pred_check
        %p1730 = pneg %p1729
      $region66: #{tpu_custom_call.1} parent=5 // pred_check_branch
        %1732 = sbr.rel (%p1730) target = $region68
      $region67: #{tpu_custom_call.1} parent=5 // pred_region
        %s1733 = ssub.s32 %s20, 2
        // Predicated region
        $region69: #{tpu_custom_call.1} parent=67 // pred_check
          %p1734 = pneg %p243
        $region70: #{tpu_custom_call.1} parent=67 // pred_check_branch
          %1736 = sbr.rel (%p1734) target = $region72
        $region71: #{tpu_custom_call.1} parent=67 // pred_region
          %s1737 = sand.u32 %s228, 1
          %s1738 = scalar_lea.sflag [#allocation5], %s1737
          %s1739 = sand.u32 %s228, 1
          %s1740 = scalar_lea.vmem [#allocation6], %s1739
          %1742 = dma.done %s1738, 16
        $region72: #{tpu_custom_call.1} parent=67 // pred_fallthru
          _
      $region68: #{tpu_custom_call.1} parent=5 // pred_fallthru
        _
    $region6: #{tpu_custom_call.1} parent=1 // loop_footer
      %s24 = sadd.s32 1, %s20
    $region7: #{tpu_custom_call.1} parent=1 // loop_footer_branch
      %19 = sbr.rel target = $region3
    $region8: #{tpu_custom_call.1} parent=1 // loop_exit
      _
    %1743 = vsyncpa [#allocation4], 1
    %s1744 = scalar_lea.sflag [#allocation4], 1
    %1745 = vsyncpa %s1744, 1
    %1746 = vsyncpa [#allocation5], 1
    %s1747 = scalar_lea.sflag [#allocation5], 1
    %1748 = vsyncpa %s1747, 1

</llo_original>
